<compile_context>
chip_gen: v5e
topology: v5e:2x2
jax: 0.10.0
libtpu: 0.0.40
codegen_flags: <defaults>
</compile_context>

<pallas_src>
import functools

import jax
import jax.numpy as jnp
from jax.experimental import pallas as pl
from jax.experimental.pallas import tpu as pltpu

# Layer widths match the PyTorch module exactly.
ENC_DIMS = [28 * 28, 128, 64, 12, 3]
DEC_DIMS = [3, 12, 64, 128, 28 * 28]

ENC_PAD = 128        # lane-dense padded width for the 3-wide encoded output
DEFAULT_TB = 1024    # max batch tile (rows); >1024 gives ~0 measured roofline gain


def _round_up(n, m):
    return ((n + m - 1) // m) * m


def _cdiv(a, b):
    return (a + b - 1) // b


def _sigmoid_tanh(z):
    # sigmoid(z) == 0.5 * tanh(z / 2) + 0.5  (exact identity).
    # One EUP transcendental per element instead of exp + reciprocal.
    return 0.5 * jnp.tanh(0.5 * z) + 0.5


def autoencoder_kernel(x_ref,
                       w1, b1, w2, b2, w3, b3,    # encoder Linear+Tanh layers
                       w4p, b4p,                  # encoder head, lane-padded to 128
                       w45, b45,                  # fused (W4@W5, b4@W5+b5) 12->12
                       w6, b6, w7, b7, w8, b8,    # decoder layers
                       enc_ref, dec_ref):
    def dot(a, w_ref):
        w = w_ref[...]
        # If weights are stored bf16 (allow_bf16_matmul), cast the activation
        # operand too; accumulation stays f32 via preferred_element_type.
        return jnp.dot(a.astype(w.dtype), w, preferred_element_type=jnp.float32)

    h = x_ref[...]

    # ----- encoder: Linear-Tanh x3 -----
    h = jnp.tanh(dot(h, w1) + b1[...])
    h = jnp.tanh(dot(h, w2) + b2[...])
    h3 = jnp.tanh(dot(h, w3) + b3[...])

    # encoded = h3 @ W4 + b4, emitted as a lane-dense (TB, 128) slab
    # (columns 3.. are zero because W4/b4 are zero-padded).
    enc_ref[...] = (dot(h3, w4p) + b4p[...]).astype(enc_ref.dtype)

    # ----- decoder -----
    # First decoder layer uses the exact algebraic fold of the 12x3 / 3x12 pair:
    #   tanh(encoded @ W5 + b5) == tanh(h3 @ (W4@W5) + (b4@W5 + b5))
    h = jnp.tanh(dot(h3, w45) + b45[...])
    h = jnp.tanh(dot(h, w6) + b6[...])
    h = jnp.tanh(dot(h, w7) + b7[...])
    dec_ref[...] = _sigmoid_tanh(dot(h, w8) + b8[...]).astype(dec_ref.dtype)


@functools.partial(jax.jit,
                   static_argnames=("tb", "allow_bf16_matmul", "bf16_outputs"))
def autoencoder_forward(x, params, *, tb=DEFAULT_TB,
                        allow_bf16_matmul=False, bf16_outputs=False):
    """params: flat list [w1, b1, ..., w8, b8]; W:(in,out), b:(1,out)."""
    B, D = x.shape
    assert D == ENC_DIMS[0]

    # --- adaptive batch tiling / grid shaping ---
    # >=2 tiles always; even tile count so v7x megacore ("parallel") splits the
    # grid across both TensorCores; >=4 tiles once there is enough work so the
    # double-buffered DMA pipeline reaches steady state.
    n_tiles = max(2, _cdiv(B, tb))
    if B >= 1024:
        n_tiles = max(n_tiles, 4)
    n_tiles = _round_up(n_tiles, 2)
    # TB multiple of 16: valid sublane tiling for both f32 (8) and bf16 (16) stores.
    TB = _round_up(_cdiv(B, n_tiles), 16)
    B_pad = n_tiles * TB
    x_p = x if B_pad == B else jnp.pad(x, ((0, B_pad - B), (0, 0)))

    (w1, b1, w2, b2, w3, b3, w4, b4,
     w5, b5, w6, b6, w7, b7, w8, b8) = params

    # Lane-pad the 3-wide encoder head so the encoded-output DMA is lane-dense.
    w4p = jnp.zeros((w4.shape[0], ENC_PAD), jnp.float32).at[:, :w4.shape[1]].set(w4)
    b4p = jnp.zeros((1, ENC_PAD), jnp.float32).at[:, :b4.shape[1]].set(b4)

    # Fold the 12x3 / 3x12 bottleneck pair (exact, no nonlinearity between them;
    # only changes f32 summation order vs the sequential reference).
    hp = jax.lax.Precision.HIGHEST
    w45 = jnp.dot(w4, w5, precision=hp)            # (12, 12)
    b45 = jnp.dot(b4, w5, precision=hp) + b5       # (1, 12)

    # Optional bf16 weight storage (MXU-operand cast); biases stay f32 since
    # they are added to the f32 accumulator.
    w_dtype = jnp.bfloat16 if allow_bf16_matmul else jnp.float32
    def wcast(w):
        return w.astype(w_dtype)

    kernel_params = [wcast(w1), b1, wcast(w2), b2, wcast(w3), b3,
                     wcast(w4p), b4p, wcast(w45), b45,
                     wcast(w6), b6, wcast(w7), b7, wcast(w8), b8]

    out_dtype = jnp.bfloat16 if bf16_outputs else jnp.float32

    def resident(p):
        # Whole-array block, constant block index -> DMA'd once, VMEM-resident
        # across all batch tiles.
        return pl.BlockSpec(p.shape, lambda i: (0, 0))

    grid = (B_pad // TB,)
    enc_p, dec_p = pl.pallas_call(
        autoencoder_kernel,
        out_shape=(
            jax.ShapeDtypeStruct((B_pad, ENC_PAD), out_dtype),       # encoded (padded)
            jax.ShapeDtypeStruct((B_pad, DEC_DIMS[-1]), out_dtype),  # decoded
        ),
        grid=grid,
        in_specs=[pl.BlockSpec((TB, D), lambda i: (i, 0))]
                 + [resident(p) for p in kernel_params],
        out_specs=(
            pl.BlockSpec((TB, ENC_PAD), lambda i: (i, 0)),
            pl.BlockSpec((TB, DEC_DIMS[-1]), lambda i: (i, 0)),
        ),
        compiler_params=pltpu.CompilerParams(
            dimension_semantics=("parallel",),       # megacore split on v7x
            vmem_limit_bytes=32 * 1024 * 1024,       # TB<=1024 working set ~20 MB
        ),
    )(x_p, *kernel_params)

    # Padding rows hold garbage (sigmoid of biases); never read them.
    encoded = enc_p[:B, :ENC_DIMS[-1]]
    decoded = dec_p[:B, :]
    return encoded, decoded


def init_params(key):
    """Deterministic synthetic params: W:(in,out), b:(1,out), PyTorch-style scale."""
    params = []
    for dims in (ENC_DIMS, DEC_DIMS):
        for fan_in, fan_out in zip(dims[:-1], dims[1:]):
            key, kw, kb = jax.random.split(key, 3)
            bound = 1.0 / jnp.sqrt(fan_in)
            w = jax.random.uniform(kw, (fan_in, fan_out), jnp.float32, -bound, bound)
            b = jax.random.uniform(kb, (1, fan_out), jnp.float32, -bound, bound)
            params += [w, b]
    return params


def reference_forward(x, params):
    h = x
    for i in range(3):
        h = jnp.tanh(h @ params[2 * i] + params[2 * i + 1])
    encoded = h @ params[6] + params[7]
    h = encoded
    for i in range(4, 7):
        h = jnp.tanh(h @ params[2 * i] + params[2 * i + 1])
    decoded = jax.nn.sigmoid(h @ params[14] + params[15])
    return encoded, decoded


if __name__ == "__main__":
    key = jax.random.PRNGKey(0)
    key, kx = jax.random.split(key)

    B = 8
    x = jax.random.uniform(kx, (B, 28 * 28), jnp.float32)   # MNIST-style flattened input
    params = init_params(key)

    # Default (f32) path: must match the f32 reference tightly.
    encoded, decoded = autoencoder_forward(x, params)
    jax.block_until_ready((encoded, decoded))

    enc_ref, dec_ref = reference_forward(x, params)
    assert encoded.shape == (B, 3) and decoded.shape == (B, 28 * 28)
    assert jnp.allclose(encoded, enc_ref, atol=1e-4, rtol=1e-4)
    assert jnp.allclose(decoded, dec_ref, atol=1e-4, rtol=1e-4)

    # Gated fast path (v5e MXU relief + halved HBM writeback): bf16 matmul
    # operands + bf16 outputs.  Looser tolerance by design.
    enc_bf, dec_bf = autoencoder_forward(x, params,
                                         allow_bf16_matmul=True,
                                         bf16_outputs=True)
    jax.block_until_ready((enc_bf, dec_bf))
    assert enc_bf.dtype == jnp.bfloat16 and dec_bf.dtype == jnp.bfloat16
    assert jnp.allclose(enc_bf.astype(jnp.float32), enc_ref, atol=1e-1, rtol=1e-1)
    assert jnp.allclose(dec_bf.astype(jnp.float32), dec_ref, atol=1e-1, rtol=1e-1)

    print("KERNEL_OK")
</pallas_src>

<mosaic_0001>
module attributes {stable_mosaic.version = 11 : i64} {
  func.func @autoencoder_kernel(%arg0: i32, %arg1: memref<16x784xf32, #tpu.memory_space<vmem>>, %arg2: memref<784x128xf32, #tpu.memory_space<vmem>>, %arg3: memref<1x128xf32, #tpu.memory_space<vmem>>, %arg4: memref<128x64xf32, #tpu.memory_space<vmem>>, %arg5: memref<1x64xf32, #tpu.memory_space<vmem>>, %arg6: memref<64x12xf32, #tpu.memory_space<vmem>>, %arg7: memref<1x12xf32, #tpu.memory_space<vmem>>, %arg8: memref<12x128xf32, #tpu.memory_space<vmem>>, %arg9: memref<1x128xf32, #tpu.memory_space<vmem>>, %arg10: memref<12x12xf32, #tpu.memory_space<vmem>>, %arg11: memref<1x12xf32, #tpu.memory_space<vmem>>, %arg12: memref<12x64xf32, #tpu.memory_space<vmem>>, %arg13: memref<1x64xf32, #tpu.memory_space<vmem>>, %arg14: memref<64x128xf32, #tpu.memory_space<vmem>>, %arg15: memref<1x128xf32, #tpu.memory_space<vmem>>, %arg16: memref<128x784xf32, #tpu.memory_space<vmem>>, %arg17: memref<1x784xf32, #tpu.memory_space<vmem>>, %arg18: memref<16x128xf32, #tpu.memory_space<vmem>>, %arg19: memref<16x784xf32, #tpu.memory_space<vmem>>) attributes {dimension_semantics = [#tpu.dimension_semantics<parallel>], iteration_bounds = array<i64: 2>, scalar_prefetch = 0 : i64, scratch_operands = 0 : i64, tpu.core_type = #tpu.core_type<tc>, window_params = [{transform_indices = @transform_0, window_bounds = array<i64: 16, 784>}, {pipeline_mode = #tpu.pipeline_mode<synchronous>, transform_indices = @transform_1, window_bounds = array<i64: 784, 128>}, {pipeline_mode = #tpu.pipeline_mode<synchronous>, transform_indices = @transform_2, window_bounds = array<i64: 1, 128>}, {pipeline_mode = #tpu.pipeline_mode<synchronous>, transform_indices = @transform_3, window_bounds = array<i64: 128, 64>}, {pipeline_mode = #tpu.pipeline_mode<synchronous>, transform_indices = @transform_4, window_bounds = array<i64: 1, 64>}, {pipeline_mode = #tpu.pipeline_mode<synchronous>, transform_indices = @transform_5, window_bounds = array<i64: 64, 12>}, {pipeline_mode = #tpu.pipeline_mode<synchronous>, transform_indices = @transform_6, window_bounds = array<i64: 1, 12>}, {pipeline_mode = #tpu.pipeline_mode<synchronous>, transform_indices = @transform_7, window_bounds = array<i64: 12, 128>}, {pipeline_mode = #tpu.pipeline_mode<synchronous>, transform_indices = @transform_8, window_bounds = array<i64: 1, 128>}, {pipeline_mode = #tpu.pipeline_mode<synchronous>, transform_indices = @transform_9, window_bounds = array<i64: 12, 12>}, {pipeline_mode = #tpu.pipeline_mode<synchronous>, transform_indices = @transform_10, window_bounds = array<i64: 1, 12>}, {pipeline_mode = #tpu.pipeline_mode<synchronous>, transform_indices = @transform_11, window_bounds = array<i64: 12, 64>}, {pipeline_mode = #tpu.pipeline_mode<synchronous>, transform_indices = @transform_12, window_bounds = array<i64: 1, 64>}, {pipeline_mode = #tpu.pipeline_mode<synchronous>, transform_indices = @transform_13, window_bounds = array<i64: 64, 128>}, {pipeline_mode = #tpu.pipeline_mode<synchronous>, transform_indices = @transform_14, window_bounds = array<i64: 1, 128>}, {pipeline_mode = #tpu.pipeline_mode<synchronous>, transform_indices = @transform_15, window_bounds = array<i64: 128, 784>}, {pipeline_mode = #tpu.pipeline_mode<synchronous>, transform_indices = @transform_16, window_bounds = array<i64: 1, 784>}, {transform_indices = @transform_17, window_bounds = array<i64: 16, 128>}, {transform_indices = @transform_18, window_bounds = array<i64: 16, 784>}]} {
    %c0 = arith.constant 0 : index
    %c0_0 = arith.constant 0 : index
    %0 = vector.load %arg1[%c0, %c0_0] : memref<16x784xf32, #tpu.memory_space<vmem>>, vector<16x784xf32>
    %c0_1 = arith.constant 0 : index
    %c0_2 = arith.constant 0 : index
    %1 = vector.load %arg2[%c0_1, %c0_2] : memref<784x128xf32, #tpu.memory_space<vmem>>, vector<784x128xf32>
    %cst = arith.constant dense<0.000000e+00> : vector<16x128xf32>
    %2 = tpu.matmul %0, %1, %cst {dimension_numbers = #tpu.dot_dimension_numbers<[1], [0], [0], [1], [0, 0, 1, 1], [], []>} : vector<16x784xf32>, vector<784x128xf32>, vector<16x128xf32> -> vector<16x128xf32>
    %c0_3 = arith.constant 0 : index
    %c0_4 = arith.constant 0 : index
    %3 = vector.load %arg3[%c0_3, %c0_4] : memref<1x128xf32, #tpu.memory_space<vmem>>, vector<1x128xf32>
    %4 = vector.broadcast %3 : vector<1x128xf32> to vector<16x128xf32>
    %5 = arith.addf %2, %4 : vector<16x128xf32>
    %6 = math.tanh %5 : vector<16x128xf32>
    %c0_5 = arith.constant 0 : index
    %c0_6 = arith.constant 0 : index
    %7 = vector.load %arg4[%c0_5, %c0_6] : memref<128x64xf32, #tpu.memory_space<vmem>>, vector<128x64xf32>
    %cst_7 = arith.constant dense<0.000000e+00> : vector<16x64xf32>
    %8 = tpu.matmul %6, %7, %cst_7 {dimension_numbers = #tpu.dot_dimension_numbers<[1], [0], [0], [1], [0, 0, 1, 1], [], []>} : vector<16x128xf32>, vector<128x64xf32>, vector<16x64xf32> -> vector<16x64xf32>
    %c0_8 = arith.constant 0 : index
    %c0_9 = arith.constant 0 : index
    %9 = vector.load %arg5[%c0_8, %c0_9] : memref<1x64xf32, #tpu.memory_space<vmem>>, vector<1x64xf32>
    %10 = vector.broadcast %9 : vector<1x64xf32> to vector<16x64xf32>
    %11 = arith.addf %8, %10 : vector<16x64xf32>
    %12 = math.tanh %11 : vector<16x64xf32>
    %c0_10 = arith.constant 0 : index
    %c0_11 = arith.constant 0 : index
    %13 = vector.load %arg6[%c0_10, %c0_11] : memref<64x12xf32, #tpu.memory_space<vmem>>, vector<64x12xf32>
    %cst_12 = arith.constant dense<0.000000e+00> : vector<16x12xf32>
    %14 = tpu.matmul %12, %13, %cst_12 {dimension_numbers = #tpu.dot_dimension_numbers<[1], [0], [0], [1], [0, 0, 1, 1], [], []>} : vector<16x64xf32>, vector<64x12xf32>, vector<16x12xf32> -> vector<16x12xf32>
    %c0_13 = arith.constant 0 : index
    %c0_14 = arith.constant 0 : index
    %15 = vector.load %arg7[%c0_13, %c0_14] : memref<1x12xf32, #tpu.memory_space<vmem>>, vector<1x12xf32>
    %16 = vector.broadcast %15 : vector<1x12xf32> to vector<16x12xf32>
    %17 = arith.addf %14, %16 : vector<16x12xf32>
    %18 = math.tanh %17 : vector<16x12xf32>
    %c0_15 = arith.constant 0 : index
    %c0_16 = arith.constant 0 : index
    %19 = vector.load %arg8[%c0_15, %c0_16] : memref<12x128xf32, #tpu.memory_space<vmem>>, vector<12x128xf32>
    %cst_17 = arith.constant dense<0.000000e+00> : vector<16x128xf32>
    %20 = tpu.matmul %18, %19, %cst_17 {dimension_numbers = #tpu.dot_dimension_numbers<[1], [0], [0], [1], [0, 0, 1, 1], [], []>} : vector<16x12xf32>, vector<12x128xf32>, vector<16x128xf32> -> vector<16x128xf32>
    %c0_18 = arith.constant 0 : index
    %c0_19 = arith.constant 0 : index
    %21 = vector.load %arg9[%c0_18, %c0_19] : memref<1x128xf32, #tpu.memory_space<vmem>>, vector<1x128xf32>
    %22 = vector.broadcast %21 : vector<1x128xf32> to vector<16x128xf32>
    %23 = arith.addf %20, %22 : vector<16x128xf32>
    %c0_20 = arith.constant 0 : index
    %c0_21 = arith.constant 0 : index
    %24 = vector.load %arg18[%c0_20, %c0_21] : memref<16x128xf32, #tpu.memory_space<vmem>>, vector<16x128xf32>
    tpu.vector_store %arg18[%c0_20, %c0_21], %23 {strides = array<i32>} : memref<16x128xf32, #tpu.memory_space<vmem>>, vector<16x128xf32>,
    %c0_22 = arith.constant 0 : index
    %c0_23 = arith.constant 0 : index
    %25 = vector.load %arg10[%c0_22, %c0_23] : memref<12x12xf32, #tpu.memory_space<vmem>>, vector<12x12xf32>
    %cst_24 = arith.constant dense<0.000000e+00> : vector<16x12xf32>
    %26 = tpu.matmul %18, %25, %cst_24 {dimension_numbers = #tpu.dot_dimension_numbers<[1], [0], [0], [1], [0, 0, 1, 1], [], []>} : vector<16x12xf32>, vector<12x12xf32>, vector<16x12xf32> -> vector<16x12xf32>
    %c0_25 = arith.constant 0 : index
    %c0_26 = arith.constant 0 : index
    %27 = vector.load %arg11[%c0_25, %c0_26] : memref<1x12xf32, #tpu.memory_space<vmem>>, vector<1x12xf32>
    %28 = vector.broadcast %27 : vector<1x12xf32> to vector<16x12xf32>
    %29 = arith.addf %26, %28 : vector<16x12xf32>
    %30 = math.tanh %29 : vector<16x12xf32>
    %c0_27 = arith.constant 0 : index
    %c0_28 = arith.constant 0 : index
    %31 = vector.load %arg12[%c0_27, %c0_28] : memref<12x64xf32, #tpu.memory_space<vmem>>, vector<12x64xf32>
    %cst_29 = arith.constant dense<0.000000e+00> : vector<16x64xf32>
    %32 = tpu.matmul %30, %31, %cst_29 {dimension_numbers = #tpu.dot_dimension_numbers<[1], [0], [0], [1], [0, 0, 1, 1], [], []>} : vector<16x12xf32>, vector<12x64xf32>, vector<16x64xf32> -> vector<16x64xf32>
    %c0_30 = arith.constant 0 : index
    %c0_31 = arith.constant 0 : index
    %33 = vector.load %arg13[%c0_30, %c0_31] : memref<1x64xf32, #tpu.memory_space<vmem>>, vector<1x64xf32>
    %34 = vector.broadcast %33 : vector<1x64xf32> to vector<16x64xf32>
    %35 = arith.addf %32, %34 : vector<16x64xf32>
    %36 = math.tanh %35 : vector<16x64xf32>
    %c0_32 = arith.constant 0 : index
    %c0_33 = arith.constant 0 : index
    %37 = vector.load %arg14[%c0_32, %c0_33] : memref<64x128xf32, #tpu.memory_space<vmem>>, vector<64x128xf32>
    %cst_34 = arith.constant dense<0.000000e+00> : vector<16x128xf32>
    %38 = tpu.matmul %36, %37, %cst_34 {dimension_numbers = #tpu.dot_dimension_numbers<[1], [0], [0], [1], [0, 0, 1, 1], [], []>} : vector<16x64xf32>, vector<64x128xf32>, vector<16x128xf32> -> vector<16x128xf32>
    %c0_35 = arith.constant 0 : index
    %c0_36 = arith.constant 0 : index
    %39 = vector.load %arg15[%c0_35, %c0_36] : memref<1x128xf32, #tpu.memory_space<vmem>>, vector<1x128xf32>
    %40 = vector.broadcast %39 : vector<1x128xf32> to vector<16x128xf32>
    %41 = arith.addf %38, %40 : vector<16x128xf32>
    %42 = math.tanh %41 : vector<16x128xf32>
    %c0_37 = arith.constant 0 : index
    %c0_38 = arith.constant 0 : index
    %43 = vector.load %arg16[%c0_37, %c0_38] : memref<128x784xf32, #tpu.memory_space<vmem>>, vector<128x784xf32>
    %cst_39 = arith.constant dense<0.000000e+00> : vector<16x784xf32>
    %44 = tpu.matmul %42, %43, %cst_39 {dimension_numbers = #tpu.dot_dimension_numbers<[1], [0], [0], [1], [0, 0, 1, 1], [], []>} : vector<16x128xf32>, vector<128x784xf32>, vector<16x784xf32> -> vector<16x784xf32>
    %c0_40 = arith.constant 0 : index
    %c0_41 = arith.constant 0 : index
    %45 = vector.load %arg17[%c0_40, %c0_41] : memref<1x784xf32, #tpu.memory_space<vmem>>, vector<1x784xf32>
    %46 = vector.broadcast %45 : vector<1x784xf32> to vector<16x784xf32>
    %47 = arith.addf %44, %46 : vector<16x784xf32>
    %cst_42 = arith.constant 5.000000e-01 : f32
    %48 = vector.broadcast %cst_42 : f32 to vector<16x784xf32>
    %49 = arith.mulf %48, %47 : vector<16x784xf32>
    %50 = math.tanh %49 : vector<16x784xf32>
    %cst_43 = arith.constant 5.000000e-01 : f32
    %51 = vector.broadcast %cst_43 : f32 to vector<16x784xf32>
    %52 = arith.mulf %51, %50 : vector<16x784xf32>
    %cst_44 = arith.constant 5.000000e-01 : f32
    %53 = vector.broadcast %cst_44 : f32 to vector<16x784xf32>
    %54 = arith.addf %52, %53 : vector<16x784xf32>
    %c0_45 = arith.constant 0 : index
    %c0_46 = arith.constant 0 : index
    %55 = vector.load %arg19[%c0_45, %c0_46] : memref<16x784xf32, #tpu.memory_space<vmem>>, vector<16x784xf32>
    tpu.vector_store %arg19[%c0_45, %c0_46], %54 {strides = array<i32>} : memref<16x784xf32, #tpu.memory_space<vmem>>, vector<16x784xf32>,
    return
  }
  func.func @transform_0(%arg0: i32) -> (i32, i32) {
    %c0_i32 = arith.constant 0 : i32
    %c0_i32_0 = arith.constant 0 : i32
    return %arg0, %c0_i32 : i32, i32
  }
  func.func @transform_1(%arg0: i32) -> (i32, i32) {
    %c0_i32 = arith.constant 0 : i32
    %c0_i32_0 = arith.constant 0 : i32
    %c0_i32_1 = arith.constant 0 : i32
    return %c0_i32, %c0_i32_0 : i32, i32
  }
  func.func @transform_2(%arg0: i32) -> (i32, i32) {
    %c0_i32 = arith.constant 0 : i32
    %c0_i32_0 = arith.constant 0 : i32
    %c0_i32_1 = arith.constant 0 : i32
    return %c0_i32, %c0_i32_0 : i32, i32
  }
  func.func @transform_3(%arg0: i32) -> (i32, i32) {
    %c0_i32 = arith.constant 0 : i32
    %c0_i32_0 = arith.constant 0 : i32
    %c0_i32_1 = arith.constant 0 : i32
    return %c0_i32, %c0_i32_0 : i32, i32
  }
  func.func @transform_4(%arg0: i32) -> (i32, i32) {
    %c0_i32 = arith.constant 0 : i32
    %c0_i32_0 = arith.constant 0 : i32
    %c0_i32_1 = arith.constant 0 : i32
    return %c0_i32, %c0_i32_0 : i32, i32
  }
  func.func @transform_5(%arg0: i32) -> (i32, i32) {
    %c0_i32 = arith.constant 0 : i32
    %c0_i32_0 = arith.constant 0 : i32
    %c0_i32_1 = arith.constant 0 : i32
    return %c0_i32, %c0_i32_0 : i32, i32
  }
  func.func @transform_6(%arg0: i32) -> (i32, i32) {
    %c0_i32 = arith.constant 0 : i32
    %c0_i32_0 = arith.constant 0 : i32
    %c0_i32_1 = arith.constant 0 : i32
    return %c0_i32, %c0_i32_0 : i32, i32
  }
  func.func @transform_7(%arg0: i32) -> (i32, i32) {
    %c0_i32 = arith.constant 0 : i32
    %c0_i32_0 = arith.constant 0 : i32
    %c0_i32_1 = arith.constant 0 : i32
    return %c0_i32, %c0_i32_0 : i32, i32
  }
  func.func @transform_8(%arg0: i32) -> (i32, i32) {
    %c0_i32 = arith.constant 0 : i32
    %c0_i32_0 = arith.constant 0 : i32
    %c0_i32_1 = arith.constant 0 : i32
    return %c0_i32, %c0_i32_0 : i32, i32
  }
  func.func @transform_9(%arg0: i32) -> (i32, i32) {
    %c0_i32 = arith.constant 0 : i32
    %c0_i32_0 = arith.constant 0 : i32
    %c0_i32_1 = arith.constant 0 : i32
    return %c0_i32, %c0_i32_0 : i32, i32
  }
  func.func @transform_10(%arg0: i32) -> (i32, i32) {
    %c0_i32 = arith.constant 0 : i32
    %c0_i32_0 = arith.constant 0 : i32
    %c0_i32_1 = arith.constant 0 : i32
    return %c0_i32, %c0_i32_0 : i32, i32
  }
  func.func @transform_11(%arg0: i32) -> (i32, i32) {
    %c0_i32 = arith.constant 0 : i32
    %c0_i32_0 = arith.constant 0 : i32
    %c0_i32_1 = arith.constant 0 : i32
    return %c0_i32, %c0_i32_0 : i32, i32
  }
  func.func @transform_12(%arg0: i32) -> (i32, i32) {
    %c0_i32 = arith.constant 0 : i32
    %c0_i32_0 = arith.constant 0 : i32
    %c0_i32_1 = arith.constant 0 : i32
    return %c0_i32, %c0_i32_0 : i32, i32
  }
  func.func @transform_13(%arg0: i32) -> (i32, i32) {
    %c0_i32 = arith.constant 0 : i32
    %c0_i32_0 = arith.constant 0 : i32
    %c0_i32_1 = arith.constant 0 : i32
    return %c0_i32, %c0_i32_0 : i32, i32
  }
  func.func @transform_14(%arg0: i32) -> (i32, i32) {
    %c0_i32 = arith.constant 0 : i32
    %c0_i32_0 = arith.constant 0 : i32
    %c0_i32_1 = arith.constant 0 : i32
    return %c0_i32, %c0_i32_0 : i32, i32
  }
  func.func @transform_15(%arg0: i32) -> (i32, i32) {
    %c0_i32 = arith.constant 0 : i32
    %c0_i32_0 = arith.constant 0 : i32
    %c0_i32_1 = arith.constant 0 : i32
    return %c0_i32, %c0_i32_0 : i32, i32
  }
  func.func @transform_16(%arg0: i32) -> (i32, i32) {
    %c0_i32 = arith.constant 0 : i32
    %c0_i32_0 = arith.constant 0 : i32
    %c0_i32_1 = arith.constant 0 : i32
    return %c0_i32, %c0_i32_0 : i32, i32
  }
  func.func @transform_17(%arg0: i32) -> (i32, i32) {
    %c0_i32 = arith.constant 0 : i32
    %c0_i32_0 = arith.constant 0 : i32
    return %arg0, %c0_i32 : i32, i32
  }
  func.func @transform_18(%arg0: i32) -> (i32, i32) {
    %c0_i32 = arith.constant 0 : i32
    %c0_i32_0 = arith.constant 0 : i32
    return %arg0, %c0_i32 : i32, i32
  }
}

</mosaic_0001>

<llo_original>
// kernel: autoencoder_forward.1
$region0: #{autoencoder_forward.1}
  #allocation0 [shape = 'u32[]', space=smem, size = 0x4, offset = 0x4, fixed_abs, tag = 'smem constant byte address 0x4 - core index']
  #allocation1 [shape = 'u32[72,128]{1,0:T(1,128)}', space=vmem, size = 0x9000, scoped, tag = 'internal scratch']
  %s0 = inlined_call_operand.vmem [shape: f32[32,784], index: 0, kind: input, shape index: {}]
  %s1 = inlined_call_operand.vmem [shape: f32[784,128], index: 1, kind: input, shape index: {}]
  %s2 = inlined_call_operand.vmem [shape: f32[1,128], index: 2, kind: input, shape index: {}]
  %s3 = inlined_call_operand.vmem [shape: f32[128,64], index: 3, kind: input, shape index: {}]
  %s4 = inlined_call_operand.vmem [shape: f32[1,64], index: 4, kind: input, shape index: {}]
  %s5 = inlined_call_operand.vmem [shape: f32[64,12], index: 5, kind: input, shape index: {}]
  %s6 = inlined_call_operand.vmem [shape: f32[1,12], index: 6, kind: input, shape index: {}]
  %s7 = inlined_call_operand.vmem [shape: f32[12,128], index: 7, kind: input, shape index: {}]
  %s8 = inlined_call_operand.vmem [shape: f32[1,128], index: 8, kind: input, shape index: {}]
  %s9 = inlined_call_operand.vmem [shape: f32[12,12], index: 9, kind: input, shape index: {}]
  %s10 = inlined_call_operand.vmem [shape: f32[1,12], index: 10, kind: input, shape index: {}]
  %s11 = inlined_call_operand.vmem [shape: f32[12,64], index: 11, kind: input, shape index: {}]
  %s12 = inlined_call_operand.vmem [shape: f32[1,64], index: 12, kind: input, shape index: {}]
  %s13 = inlined_call_operand.vmem [shape: f32[64,128], index: 13, kind: input, shape index: {}]
  %s14 = inlined_call_operand.vmem [shape: f32[1,128], index: 14, kind: input, shape index: {}]
  %s15 = inlined_call_operand.vmem [shape: f32[128,784], index: 15, kind: input, shape index: {}]
  %s16 = inlined_call_operand.vmem [shape: f32[1,784], index: 16, kind: input, shape index: {}]
  %s17 = inlined_call_operand.vmem [shape: f32[32,128], index: 17, kind: output, shape index: {0}]
  %s18 = inlined_call_operand.vmem [shape: f32[32,784], index: 18, kind: output, shape index: {1}]
  %19 = xla_tuple %s17, %s18
  %s20 = sld [smem:[#allocation0]]
  $region109: #{autoencoder_forward.1} parent=0
    _
  %s22 = ssub.s32 1, %s20
  %s23 = scalar_select 0, %s22, %s20
  loop: start=0, step=1, limit=4
  $region2: #{autoencoder_forward.1} parent=0 // loop_pre_header
    _
  $region3: #{autoencoder_forward.1} parent=0 // loop_header
    %s25 = sphi 0, %s29
    %p26 = scmp.ge.s32.totalorder %s25, 4
    %s35 = sphi 0, %s37
    %s38 = sphi 0, %s35
    %s39 = sphi 0, %s38
    %s55 = sphi 0, %s39
    %s59 = sphi 0, %s59
    %s61 = sphi 0, %s59
    %s62 = sphi 0, %s61
    %s76 = sphi 0, %s62
    %s80 = sphi 0, %s80
    %s82 = sphi 0, %s80
    %s83 = sphi 0, %s82
    %s97 = sphi 0, %s83
    %s101 = sphi 0, %s101
    %s103 = sphi 0, %s101
    %s104 = sphi 0, %s103
    %s118 = sphi 0, %s104
    %s122 = sphi 0, %s122
    %s124 = sphi 0, %s122
    %s125 = sphi 0, %s124
    %s139 = sphi 0, %s125
    %s143 = sphi 0, %s143
    %s145 = sphi 0, %s143
    %s146 = sphi 0, %s145
    %s160 = sphi 0, %s146
    %s164 = sphi 0, %s164
    %s166 = sphi 0, %s164
    %s167 = sphi 0, %s166
    %s181 = sphi 0, %s167
    %s185 = sphi 0, %s185
    %s187 = sphi 0, %s185
    %s188 = sphi 0, %s187
    %s202 = sphi 0, %s188
    %s206 = sphi 0, %s206
    %s208 = sphi 0, %s206
    %s209 = sphi 0, %s208
    %s223 = sphi 0, %s209
    %s227 = sphi 0, %s227
    %s229 = sphi 0, %s227
    %s230 = sphi 0, %s229
    %s244 = sphi 0, %s230
    %s248 = sphi 0, %s248
    %s250 = sphi 0, %s248
    %s251 = sphi 0, %s250
    %s265 = sphi 0, %s251
    %s269 = sphi 0, %s269
    %s271 = sphi 0, %s269
    %s272 = sphi 0, %s271
    %s286 = sphi 0, %s272
    %s290 = sphi 0, %s290
    %s292 = sphi 0, %s290
    %s293 = sphi 0, %s292
    %s307 = sphi 0, %s293
    %s311 = sphi 0, %s311
    %s313 = sphi 0, %s311
    %s314 = sphi 0, %s313
    %s328 = sphi 0, %s314
    %s332 = sphi 0, %s332
    %s334 = sphi 0, %s332
    %s335 = sphi 0, %s334
    %s349 = sphi 0, %s335
    %s353 = sphi 0, %s353
    %s355 = sphi 0, %s353
    %s356 = sphi 0, %s355
    %s370 = sphi 0, %s356
    %s374 = sphi 0, %s374
    %s376 = sphi 0, %s374
    %s377 = sphi 0, %s376
    %s391 = sphi 0, %s377
    %s397 = sphi 0, %s399
    %s400 = sphi 0, %s397
    %s401 = sphi 0, %s400
    %s417 = sphi 0, %s401
    %s423 = sphi 0, %s425
    %s426 = sphi 0, %s423
    %s427 = sphi 0, %s426
    %s443 = sphi 0, %s427
  $region4: #{autoencoder_forward.1} parent=0 // loop_header_branch
    %28 = sbr.rel (%p26) target = $region8
  $region5: #{autoencoder_forward.1} parent=0 // loop_body
    %s30 = ssub.s32 %s25, 1
    %s31 = ssub.s32 %s25, 2
    %s32 = sadd.s32 %s25, 1
    %s33 = ssub.s32 %s25, %s32
    %p34 = scmp.eq.s32.totalorder %s33, 0
    %s36 = sadd.s32 %s35, 1
    %s37 = scalar_select %p34, %s35, %s36
    %p40 = pneg %p34
    %p41 = scmp.eq.s32.totalorder %s25, 1
    %p42 = por %p40, %p41
    %p43 = scmp.ne.s32.totalorder %s35, %s38
    %p44 = scmp.eq.s32.totalorder %s25, 0
    %p45 = por %p43, %p44
    %p46 = scmp.ne.s32.totalorder %s35, %s38
    %p47 = scmp.eq.s32.totalorder %s30, 1
    %p48 = por %p46, %p47
    %p49 = scmp.ne.s32.totalorder %s38, %s39
    %p50 = scmp.eq.s32.totalorder %s30, 0
    %p51 = por %p49, %p50
    %p52 = scmp.ne.s32.totalorder %s38, %s39
    %p53 = scmp.eq.s32.totalorder %s31, 1
    %p54 = por %p52, %p53
    %p56 = scmp.ne.s32.totalorder %s39, %s55
    %p57 = scmp.eq.s32.totalorder %s31, 0
    %p58 = por %p56, %p57
    %s60 = sadd.s32 %s59, 1
    %p63 = scmp.eq.s32.totalorder %s25, 1
    %p64 = scmp.ne.s32.totalorder %s59, %s61
    %p65 = scmp.eq.s32.totalorder %s25, 0
    %p66 = por %p64, %p65
    %p67 = scmp.ne.s32.totalorder %s59, %s61
    %p68 = scmp.eq.s32.totalorder %s30, 1
    %p69 = por %p67, %p68
    %p70 = scmp.ne.s32.totalorder %s61, %s62
    %p71 = scmp.eq.s32.totalorder %s30, 0
    %p72 = por %p70, %p71
    %p73 = scmp.ne.s32.totalorder %s61, %s62
    %p74 = scmp.eq.s32.totalorder %s31, 1
    %p75 = por %p73, %p74
    %p77 = scmp.ne.s32.totalorder %s62, %s76
    %p78 = scmp.eq.s32.totalorder %s31, 0
    %p79 = por %p77, %p78
    %s81 = sadd.s32 %s80, 1
    %p84 = scmp.eq.s32.totalorder %s25, 1
    %p85 = scmp.ne.s32.totalorder %s80, %s82
    %p86 = scmp.eq.s32.totalorder %s25, 0
    %p87 = por %p85, %p86
    %p88 = scmp.ne.s32.totalorder %s80, %s82
    %p89 = scmp.eq.s32.totalorder %s30, 1
    %p90 = por %p88, %p89
    %p91 = scmp.ne.s32.totalorder %s82, %s83
    %p92 = scmp.eq.s32.totalorder %s30, 0
    %p93 = por %p91, %p92
    %p94 = scmp.ne.s32.totalorder %s82, %s83
    %p95 = scmp.eq.s32.totalorder %s31, 1
    %p96 = por %p94, %p95
    %p98 = scmp.ne.s32.totalorder %s83, %s97
    %p99 = scmp.eq.s32.totalorder %s31, 0
    %p100 = por %p98, %p99
    %s102 = sadd.s32 %s101, 1
    %p105 = scmp.eq.s32.totalorder %s25, 1
    %p106 = scmp.ne.s32.totalorder %s101, %s103
    %p107 = scmp.eq.s32.totalorder %s25, 0
    %p108 = por %p106, %p107
    %p109 = scmp.ne.s32.totalorder %s101, %s103
    %p110 = scmp.eq.s32.totalorder %s30, 1
    %p111 = por %p109, %p110
    %p112 = scmp.ne.s32.totalorder %s103, %s104
    %p113 = scmp.eq.s32.totalorder %s30, 0
    %p114 = por %p112, %p113
    %p115 = scmp.ne.s32.totalorder %s103, %s104
    %p116 = scmp.eq.s32.totalorder %s31, 1
    %p117 = por %p115, %p116
    %p119 = scmp.ne.s32.totalorder %s104, %s118
    %p120 = scmp.eq.s32.totalorder %s31, 0
    %p121 = por %p119, %p120
    %s123 = sadd.s32 %s122, 1
    %p126 = scmp.eq.s32.totalorder %s25, 1
    %p127 = scmp.ne.s32.totalorder %s122, %s124
    %p128 = scmp.eq.s32.totalorder %s25, 0
    %p129 = por %p127, %p128
    %p130 = scmp.ne.s32.totalorder %s122, %s124
    %p131 = scmp.eq.s32.totalorder %s30, 1
    %p132 = por %p130, %p131
    %p133 = scmp.ne.s32.totalorder %s124, %s125
    %p134 = scmp.eq.s32.totalorder %s30, 0
    %p135 = por %p133, %p134
    %p136 = scmp.ne.s32.totalorder %s124, %s125
    %p137 = scmp.eq.s32.totalorder %s31, 1
    %p138 = por %p136, %p137
    %p140 = scmp.ne.s32.totalorder %s125, %s139
    %p141 = scmp.eq.s32.totalorder %s31, 0
    %p142 = por %p140, %p141
    %s144 = sadd.s32 %s143, 1
    %p147 = scmp.eq.s32.totalorder %s25, 1
    %p148 = scmp.ne.s32.totalorder %s143, %s145
    %p149 = scmp.eq.s32.totalorder %s25, 0
    %p150 = por %p148, %p149
    %p151 = scmp.ne.s32.totalorder %s143, %s145
    %p152 = scmp.eq.s32.totalorder %s30, 1
    %p153 = por %p151, %p152
    %p154 = scmp.ne.s32.totalorder %s145, %s146
    %p155 = scmp.eq.s32.totalorder %s30, 0
    %p156 = por %p154, %p155
    %p157 = scmp.ne.s32.totalorder %s145, %s146
    %p158 = scmp.eq.s32.totalorder %s31, 1
    %p159 = por %p157, %p158
    %p161 = scmp.ne.s32.totalorder %s146, %s160
    %p162 = scmp.eq.s32.totalorder %s31, 0
    %p163 = por %p161, %p162
    %s165 = sadd.s32 %s164, 1
    %p168 = scmp.eq.s32.totalorder %s25, 1
    %p169 = scmp.ne.s32.totalorder %s164, %s166
    %p170 = scmp.eq.s32.totalorder %s25, 0
    %p171 = por %p169, %p170
    %p172 = scmp.ne.s32.totalorder %s164, %s166
    %p173 = scmp.eq.s32.totalorder %s30, 1
    %p174 = por %p172, %p173
    %p175 = scmp.ne.s32.totalorder %s166, %s167
    %p176 = scmp.eq.s32.totalorder %s30, 0
    %p177 = por %p175, %p176
    %p178 = scmp.ne.s32.totalorder %s166, %s167
    %p179 = scmp.eq.s32.totalorder %s31, 1
    %p180 = por %p178, %p179
    %p182 = scmp.ne.s32.totalorder %s167, %s181
    %p183 = scmp.eq.s32.totalorder %s31, 0
    %p184 = por %p182, %p183
    %s186 = sadd.s32 %s185, 1
    %p189 = scmp.eq.s32.totalorder %s25, 1
    %p190 = scmp.ne.s32.totalorder %s185, %s187
    %p191 = scmp.eq.s32.totalorder %s25, 0
    %p192 = por %p190, %p191
    %p193 = scmp.ne.s32.totalorder %s185, %s187
    %p194 = scmp.eq.s32.totalorder %s30, 1
    %p195 = por %p193, %p194
    %p196 = scmp.ne.s32.totalorder %s187, %s188
    %p197 = scmp.eq.s32.totalorder %s30, 0
    %p198 = por %p196, %p197
    %p199 = scmp.ne.s32.totalorder %s187, %s188
    %p200 = scmp.eq.s32.totalorder %s31, 1
    %p201 = por %p199, %p200
    %p203 = scmp.ne.s32.totalorder %s188, %s202
    %p204 = scmp.eq.s32.totalorder %s31, 0
    %p205 = por %p203, %p204
    %s207 = sadd.s32 %s206, 1
    %p210 = scmp.eq.s32.totalorder %s25, 1
    %p211 = scmp.ne.s32.totalorder %s206, %s208
    %p212 = scmp.eq.s32.totalorder %s25, 0
    %p213 = por %p211, %p212
    %p214 = scmp.ne.s32.totalorder %s206, %s208
    %p215 = scmp.eq.s32.totalorder %s30, 1
    %p216 = por %p214, %p215
    %p217 = scmp.ne.s32.totalorder %s208, %s209
    %p218 = scmp.eq.s32.totalorder %s30, 0
    %p219 = por %p217, %p218
    %p220 = scmp.ne.s32.totalorder %s208, %s209
    %p221 = scmp.eq.s32.totalorder %s31, 1
    %p222 = por %p220, %p221
    %p224 = scmp.ne.s32.totalorder %s209, %s223
    %p225 = scmp.eq.s32.totalorder %s31, 0
    %p226 = por %p224, %p225
    %s228 = sadd.s32 %s227, 1
    %p231 = scmp.eq.s32.totalorder %s25, 1
    %p232 = scmp.ne.s32.totalorder %s227, %s229
    %p233 = scmp.eq.s32.totalorder %s25, 0
    %p234 = por %p232, %p233
    %p235 = scmp.ne.s32.totalorder %s227, %s229
    %p236 = scmp.eq.s32.totalorder %s30, 1
    %p237 = por %p235, %p236
    %p238 = scmp.ne.s32.totalorder %s229, %s230
    %p239 = scmp.eq.s32.totalorder %s30, 0
    %p240 = por %p238, %p239
    %p241 = scmp.ne.s32.totalorder %s229, %s230
    %p242 = scmp.eq.s32.totalorder %s31, 1
    %p243 = por %p241, %p242
    %p245 = scmp.ne.s32.totalorder %s230, %s244
    %p246 = scmp.eq.s32.totalorder %s31, 0
    %p247 = por %p245, %p246
    %s249 = sadd.s32 %s248, 1
    %p252 = scmp.eq.s32.totalorder %s25, 1
    %p253 = scmp.ne.s32.totalorder %s248, %s250
    %p254 = scmp.eq.s32.totalorder %s25, 0
    %p255 = por %p253, %p254
    %p256 = scmp.ne.s32.totalorder %s248, %s250
    %p257 = scmp.eq.s32.totalorder %s30, 1
    %p258 = por %p256, %p257
    %p259 = scmp.ne.s32.totalorder %s250, %s251
    %p260 = scmp.eq.s32.totalorder %s30, 0
    %p261 = por %p259, %p260
    %p262 = scmp.ne.s32.totalorder %s250, %s251
    %p263 = scmp.eq.s32.totalorder %s31, 1
    %p264 = por %p262, %p263
    %p266 = scmp.ne.s32.totalorder %s251, %s265
    %p267 = scmp.eq.s32.totalorder %s31, 0
    %p268 = por %p266, %p267
    %s270 = sadd.s32 %s269, 1
    %p273 = scmp.eq.s32.totalorder %s25, 1
    %p274 = scmp.ne.s32.totalorder %s269, %s271
    %p275 = scmp.eq.s32.totalorder %s25, 0
    %p276 = por %p274, %p275
    %p277 = scmp.ne.s32.totalorder %s269, %s271
    %p278 = scmp.eq.s32.totalorder %s30, 1
    %p279 = por %p277, %p278
    %p280 = scmp.ne.s32.totalorder %s271, %s272
    %p281 = scmp.eq.s32.totalorder %s30, 0
    %p282 = por %p280, %p281
    %p283 = scmp.ne.s32.totalorder %s271, %s272
    %p284 = scmp.eq.s32.totalorder %s31, 1
    %p285 = por %p283, %p284
    %p287 = scmp.ne.s32.totalorder %s272, %s286
    %p288 = scmp.eq.s32.totalorder %s31, 0
    %p289 = por %p287, %p288
    %s291 = sadd.s32 %s290, 1
    %p294 = scmp.eq.s32.totalorder %s25, 1
    %p295 = scmp.ne.s32.totalorder %s290, %s292
    %p296 = scmp.eq.s32.totalorder %s25, 0
    %p297 = por %p295, %p296
    %p298 = scmp.ne.s32.totalorder %s290, %s292
    %p299 = scmp.eq.s32.totalorder %s30, 1
    %p300 = por %p298, %p299
    %p301 = scmp.ne.s32.totalorder %s292, %s293
    %p302 = scmp.eq.s32.totalorder %s30, 0
    %p303 = por %p301, %p302
    %p304 = scmp.ne.s32.totalorder %s292, %s293
    %p305 = scmp.eq.s32.totalorder %s31, 1
    %p306 = por %p304, %p305
    %p308 = scmp.ne.s32.totalorder %s293, %s307
    %p309 = scmp.eq.s32.totalorder %s31, 0
    %p310 = por %p308, %p309
    %s312 = sadd.s32 %s311, 1
    %p315 = scmp.eq.s32.totalorder %s25, 1
    %p316 = scmp.ne.s32.totalorder %s311, %s313
    %p317 = scmp.eq.s32.totalorder %s25, 0
    %p318 = por %p316, %p317
    %p319 = scmp.ne.s32.totalorder %s311, %s313
    %p320 = scmp.eq.s32.totalorder %s30, 1
    %p321 = por %p319, %p320
    %p322 = scmp.ne.s32.totalorder %s313, %s314
    %p323 = scmp.eq.s32.totalorder %s30, 0
    %p324 = por %p322, %p323
    %p325 = scmp.ne.s32.totalorder %s313, %s314
    %p326 = scmp.eq.s32.totalorder %s31, 1
    %p327 = por %p325, %p326
    %p329 = scmp.ne.s32.totalorder %s314, %s328
    %p330 = scmp.eq.s32.totalorder %s31, 0
    %p331 = por %p329, %p330
    %s333 = sadd.s32 %s332, 1
    %p336 = scmp.eq.s32.totalorder %s25, 1
    %p337 = scmp.ne.s32.totalorder %s332, %s334
    %p338 = scmp.eq.s32.totalorder %s25, 0
    %p339 = por %p337, %p338
    %p340 = scmp.ne.s32.totalorder %s332, %s334
    %p341 = scmp.eq.s32.totalorder %s30, 1
    %p342 = por %p340, %p341
    %p343 = scmp.ne.s32.totalorder %s334, %s335
    %p344 = scmp.eq.s32.totalorder %s30, 0
    %p345 = por %p343, %p344
    %p346 = scmp.ne.s32.totalorder %s334, %s335
    %p347 = scmp.eq.s32.totalorder %s31, 1
    %p348 = por %p346, %p347
    %p350 = scmp.ne.s32.totalorder %s335, %s349
    %p351 = scmp.eq.s32.totalorder %s31, 0
    %p352 = por %p350, %p351
    %s354 = sadd.s32 %s353, 1
    %p357 = scmp.eq.s32.totalorder %s25, 1
    %p358 = scmp.ne.s32.totalorder %s353, %s355
    %p359 = scmp.eq.s32.totalorder %s25, 0
    %p360 = por %p358, %p359
    %p361 = scmp.ne.s32.totalorder %s353, %s355
    %p362 = scmp.eq.s32.totalorder %s30, 1
    %p363 = por %p361, %p362
    %p364 = scmp.ne.s32.totalorder %s355, %s356
    %p365 = scmp.eq.s32.totalorder %s30, 0
    %p366 = por %p364, %p365
    %p367 = scmp.ne.s32.totalorder %s355, %s356
    %p368 = scmp.eq.s32.totalorder %s31, 1
    %p369 = por %p367, %p368
    %p371 = scmp.ne.s32.totalorder %s356, %s370
    %p372 = scmp.eq.s32.totalorder %s31, 0
    %p373 = por %p371, %p372
    %s375 = sadd.s32 %s374, 1
    %p378 = scmp.eq.s32.totalorder %s25, 1
    %p379 = scmp.ne.s32.totalorder %s374, %s376
    %p380 = scmp.eq.s32.totalorder %s25, 0
    %p381 = por %p379, %p380
    %p382 = scmp.ne.s32.totalorder %s374, %s376
    %p383 = scmp.eq.s32.totalorder %s30, 1
    %p384 = por %p382, %p383
    %p385 = scmp.ne.s32.totalorder %s376, %s377
    %p386 = scmp.eq.s32.totalorder %s30, 0
    %p387 = por %p385, %p386
    %p388 = scmp.ne.s32.totalorder %s376, %s377
    %p389 = scmp.eq.s32.totalorder %s31, 1
    %p390 = por %p388, %p389
    %p392 = scmp.ne.s32.totalorder %s377, %s391
    %p393 = scmp.eq.s32.totalorder %s31, 0
    %p394 = por %p392, %p393
    %s395 = ssub.s32 %s25, %s32
    %p396 = scmp.eq.s32.totalorder %s395, 0
    %s398 = sadd.s32 %s397, 1
    %s399 = scalar_select %p396, %s397, %s398
    %p402 = pneg %p396
    %p403 = scmp.eq.s32.totalorder %s25, 1
    %p404 = por %p402, %p403
    %p405 = scmp.ne.s32.totalorder %s397, %s400
    %p406 = scmp.eq.s32.totalorder %s25, 0
    %p407 = por %p405, %p406
    %p408 = scmp.ne.s32.totalorder %s397, %s400
    %p409 = scmp.eq.s32.totalorder %s30, 1
    %p410 = por %p408, %p409
    %p411 = scmp.ne.s32.totalorder %s400, %s401
    %p412 = scmp.eq.s32.totalorder %s30, 0
    %p413 = por %p411, %p412
    %p414 = scmp.ne.s32.totalorder %s400, %s401
    %p415 = scmp.eq.s32.totalorder %s31, 1
    %p416 = por %p414, %p415
    %p418 = scmp.ne.s32.totalorder %s401, %s417
    %p419 = scmp.eq.s32.totalorder %s31, 0
    %p420 = por %p418, %p419
    %s421 = ssub.s32 %s25, %s32
    %p422 = scmp.eq.s32.totalorder %s421, 0
    %s424 = sadd.s32 %s423, 1
    %s425 = scalar_select %p422, %s423, %s424
    %p428 = pneg %p422
    %p429 = scmp.eq.s32.totalorder %s25, 1
    %p430 = por %p428, %p429
    %p431 = scmp.ne.s32.totalorder %s423, %s426
    %p432 = scmp.eq.s32.totalorder %s25, 0
    %p433 = por %p431, %p432
    %p434 = scmp.ne.s32.totalorder %s423, %s426
    %p435 = scmp.eq.s32.totalorder %s30, 1
    %p436 = por %p434, %p435
    %p437 = scmp.ne.s32.totalorder %s426, %s427
    %p438 = scmp.eq.s32.totalorder %s30, 0
    %p439 = por %p437, %p438
    %p440 = scmp.ne.s32.totalorder %s426, %s427
    %p441 = scmp.eq.s32.totalorder %s31, 1
    %p442 = por %p440, %p441
    %p444 = scmp.ne.s32.totalorder %s427, %s443
    %p445 = scmp.eq.s32.totalorder %s31, 0
    %p446 = por %p444, %p445
    %p447 = scmp.le.s32.totalorder 1, %s25
    %p448 = scmp.lt.s32.totalorder %s25, 3
    %p449 = pnand %p447, %p448
    %p450 = pneg %p449
    // Predicated region
    $region9: #{autoencoder_forward.1} parent=5 // pred_check
      _
    $region10: #{autoencoder_forward.1} parent=5 // pred_check_branch
      %452 = sbr.rel (%p449) target = $region12
    $region11: #{autoencoder_forward.1} parent=5 // pred_region
      %s453 = ssub.s32 %s25, 1
      // Predicated region
      $region13: #{autoencoder_forward.1} parent=11 // pred_check
        %p454 = pneg %p72
      $region14: #{autoencoder_forward.1} parent=11 // pred_check_branch
        %456 = sbr.rel (%p454) target = $region16
      $region15: #{autoencoder_forward.1} parent=11 // pred_region
        _
      $region16: #{autoencoder_forward.1} parent=11 // pred_fallthru
        _
      // Predicated region
      $region17: #{autoencoder_forward.1} parent=11 // pred_check
        %p457 = pneg %p93
      $region18: #{autoencoder_forward.1} parent=11 // pred_check_branch
        %459 = sbr.rel (%p457) target = $region20
      $region19: #{autoencoder_forward.1} parent=11 // pred_region
        _
      $region20: #{autoencoder_forward.1} parent=11 // pred_fallthru
        _
      // Predicated region
      $region21: #{autoencoder_forward.1} parent=11 // pred_check
        %p460 = pneg %p114
      $region22: #{autoencoder_forward.1} parent=11 // pred_check_branch
        %462 = sbr.rel (%p460) target = $region24
      $region23: #{autoencoder_forward.1} parent=11 // pred_region
        _
      $region24: #{autoencoder_forward.1} parent=11 // pred_fallthru
        _
      // Predicated region
      $region25: #{autoencoder_forward.1} parent=11 // pred_check
        %p463 = pneg %p135
      $region26: #{autoencoder_forward.1} parent=11 // pred_check_branch
        %465 = sbr.rel (%p463) target = $region28
      $region27: #{autoencoder_forward.1} parent=11 // pred_region
        _
      $region28: #{autoencoder_forward.1} parent=11 // pred_fallthru
        _
      // Predicated region
      $region29: #{autoencoder_forward.1} parent=11 // pred_check
        %p466 = pneg %p156
      $region30: #{autoencoder_forward.1} parent=11 // pred_check_branch
        %468 = sbr.rel (%p466) target = $region32
      $region31: #{autoencoder_forward.1} parent=11 // pred_region
        _
      $region32: #{autoencoder_forward.1} parent=11 // pred_fallthru
        _
      // Predicated region
      $region33: #{autoencoder_forward.1} parent=11 // pred_check
        %p469 = pneg %p177
      $region34: #{autoencoder_forward.1} parent=11 // pred_check_branch
        %471 = sbr.rel (%p469) target = $region36
      $region35: #{autoencoder_forward.1} parent=11 // pred_region
        _
      $region36: #{autoencoder_forward.1} parent=11 // pred_fallthru
        _
      // Predicated region
      $region37: #{autoencoder_forward.1} parent=11 // pred_check
        %p472 = pneg %p198
      $region38: #{autoencoder_forward.1} parent=11 // pred_check_branch
        %474 = sbr.rel (%p472) target = $region40
      $region39: #{autoencoder_forward.1} parent=11 // pred_region
        _
      $region40: #{autoencoder_forward.1} parent=11 // pred_fallthru
        _
      // Predicated region
      $region41: #{autoencoder_forward.1} parent=11 // pred_check
        %p475 = pneg %p219
      $region42: #{autoencoder_forward.1} parent=11 // pred_check_branch
        %477 = sbr.rel (%p475) target = $region44
      $region43: #{autoencoder_forward.1} parent=11 // pred_region
        _
      $region44: #{autoencoder_forward.1} parent=11 // pred_fallthru
        _
      // Predicated region
      $region45: #{autoencoder_forward.1} parent=11 // pred_check
        %p478 = pneg %p240
      $region46: #{autoencoder_forward.1} parent=11 // pred_check_branch
        %480 = sbr.rel (%p478) target = $region48
      $region47: #{autoencoder_forward.1} parent=11 // pred_region
        _
      $region48: #{autoencoder_forward.1} parent=11 // pred_fallthru
        _
      // Predicated region
      $region49: #{autoencoder_forward.1} parent=11 // pred_check
        %p481 = pneg %p261
      $region50: #{autoencoder_forward.1} parent=11 // pred_check_branch
        %483 = sbr.rel (%p481) target = $region52
      $region51: #{autoencoder_forward.1} parent=11 // pred_region
        _
      $region52: #{autoencoder_forward.1} parent=11 // pred_fallthru
        _
      // Predicated region
      $region53: #{autoencoder_forward.1} parent=11 // pred_check
        %p484 = pneg %p282
      $region54: #{autoencoder_forward.1} parent=11 // pred_check_branch
        %486 = sbr.rel (%p484) target = $region56
      $region55: #{autoencoder_forward.1} parent=11 // pred_region
        _
      $region56: #{autoencoder_forward.1} parent=11 // pred_fallthru
        _
      // Predicated region
      $region57: #{autoencoder_forward.1} parent=11 // pred_check
        %p487 = pneg %p303
      $region58: #{autoencoder_forward.1} parent=11 // pred_check_branch
        %489 = sbr.rel (%p487) target = $region60
      $region59: #{autoencoder_forward.1} parent=11 // pred_region
        _
      $region60: #{autoencoder_forward.1} parent=11 // pred_fallthru
        _
      // Predicated region
      $region61: #{autoencoder_forward.1} parent=11 // pred_check
        %p490 = pneg %p324
      $region62: #{autoencoder_forward.1} parent=11 // pred_check_branch
        %492 = sbr.rel (%p490) target = $region64
      $region63: #{autoencoder_forward.1} parent=11 // pred_region
        _
      $region64: #{autoencoder_forward.1} parent=11 // pred_fallthru
        _
      // Predicated region
      $region65: #{autoencoder_forward.1} parent=11 // pred_check
        %p493 = pneg %p345
      $region66: #{autoencoder_forward.1} parent=11 // pred_check_branch
        %495 = sbr.rel (%p493) target = $region68
      $region67: #{autoencoder_forward.1} parent=11 // pred_region
        _
      $region68: #{autoencoder_forward.1} parent=11 // pred_fallthru
        _
      // Predicated region
      $region69: #{autoencoder_forward.1} parent=11 // pred_check
        %p496 = pneg %p366
      $region70: #{autoencoder_forward.1} parent=11 // pred_check_branch
        %498 = sbr.rel (%p496) target = $region72
      $region71: #{autoencoder_forward.1} parent=11 // pred_region
        _
      $region72: #{autoencoder_forward.1} parent=11 // pred_fallthru
        _
      // Predicated region
      $region73: #{autoencoder_forward.1} parent=11 // pred_check
        %p499 = pneg %p387
      $region74: #{autoencoder_forward.1} parent=11 // pred_check_branch
        %501 = sbr.rel (%p499) target = $region76
      $region75: #{autoencoder_forward.1} parent=11 // pred_region
        _
      $region76: #{autoencoder_forward.1} parent=11 // pred_fallthru
        _
    $region12: #{autoencoder_forward.1} parent=5 // pred_fallthru
      _
    %p502 = scmp.lt.s32.totalorder %s25, 2
    // Predicated region
    $region77: #{autoencoder_forward.1} parent=5 // pred_check
      %p503 = pneg %p502
    $region78: #{autoencoder_forward.1} parent=5 // pred_check_branch
      %505 = sbr.rel (%p503) target = $region80
    $region79: #{autoencoder_forward.1} parent=5 // pred_region
      // Predicated region
      $region81: #{autoencoder_forward.1} parent=79 // pred_check
        %p506 = pneg %p45
      $region82: #{autoencoder_forward.1} parent=79 // pred_check_branch
        %508 = sbr.rel (%p506) target = $region84
      $region83: #{autoencoder_forward.1} parent=79 // pred_region
        %s509 = smul.u32 2, %s25
        %p510 = scmp.lt.s32.totalorder %s509, 3
        %s511 = scalar_select %p510, %s509, 3
        %s512 = smul.addr %s511, 7
        %s513 = smul.addr %s512, 8
        %s514 = scalar_lea.vmem %s0, %s513
        %s515 = smul.u32 2, %s25
      $region84: #{autoencoder_forward.1} parent=79 // pred_fallthru
        _
    $region80: #{autoencoder_forward.1} parent=5 // pred_fallthru
      _
    %p516 = scmp.le.s32.totalorder 1, %s25
    %p517 = scmp.lt.s32.totalorder %s25, 3
    %p518 = pnand %p516, %p517
    %p519 = pneg %p518
    // Predicated region
    $region85: #{autoencoder_forward.1} parent=5 // pred_check
      _
    $region86: #{autoencoder_forward.1} parent=5 // pred_check_branch
      %521 = sbr.rel (%p518) target = $region88
    $region87: #{autoencoder_forward.1} parent=5 // pred_region
      %s522 = ssub.s32 %s25, 1
      %s523 = smul.u32 2, %s30
      %p524 = scmp.lt.s32.totalorder %s523, 3
      %s525 = scalar_select %p524, %s523, 3
      %s526 = smul.addr %s525, 7
      %s527 = smul.addr %s526, 8
      %s528 = scalar_lea.vmem %s0, %s527
      %p529 = pneg %p51
      %p530 = pneg %p48
      %p531 = pneg %p72
      %p532 = pneg %p69
      %p533 = pneg %p93
      %p534 = pneg %p90
      %p535 = pneg %p114
      %p536 = pneg %p111
      %p537 = pneg %p135
      %p538 = pneg %p132
      %p539 = pneg %p156
      %p540 = pneg %p153
      %p541 = pneg %p177
      %p542 = pneg %p174
      %p543 = pneg %p198
      %p544 = pneg %p195
      %p545 = pneg %p219
      %p546 = pneg %p216
      %p547 = pneg %p240
      %p548 = pneg %p237
      %p549 = pneg %p261
      %p550 = pneg %p258
      %p551 = pneg %p282
      %p552 = pneg %p279
      %p553 = pneg %p303
      %p554 = pneg %p300
      %p555 = pneg %p324
      %p556 = pneg %p321
      %p557 = pneg %p345
      %p558 = pneg %p342
      %p559 = pneg %p366
      %p560 = pneg %p363
      %p561 = pneg %p387
      %p562 = pneg %p384
      %p563 = pneg %p413
      %p564 = pneg %p410
      %s565 = smul.u32 2, %s30
      %p566 = scmp.lt.s32.totalorder %s565, 3
      %s567 = scalar_select %p566, %s565, 3
      %s568 = smul.addr %s567, 8
      %s569 = scalar_lea.vmem %s17, %s568
      %p570 = pneg %p439
      %p571 = pneg %p436
      %s572 = smul.u32 2, %s30
      %p573 = scmp.lt.s32.totalorder %s572, 3
      %s574 = scalar_select %p573, %s572, 3
      %s575 = smul.addr %s574, 7
      %s576 = smul.addr %s575, 8
      %s577 = scalar_lea.vmem %s18, %s576
      %s578 = smul.u32 2, %s30
      %p579 = scmp.lt.s32.totalorder %s578, 3
      %s580 = scalar_select %p579, %s578, 3
      %s581 = smul.addr %s580, 7
      %s582 = smul.addr %s581, 8
      %s583 = scalar_lea.vmem %s0, %s582
      %s584 = smul.u32 2, %s30
      %s585 = smul.u32 2, %s30
      %p586 = scmp.lt.s32.totalorder %s585, 3
      %s587 = scalar_select %p586, %s585, 3
      %s588 = smul.addr %s587, 8
      %s589 = scalar_lea.vmem %s17, %s588
      %s590 = smul.u32 2, %s30
      %s591 = smul.u32 2, %s30
      %p592 = scmp.lt.s32.totalorder %s591, 3
      %s593 = scalar_select %p592, %s591, 3
      %s594 = smul.addr %s593, 7
      %s595 = smul.addr %s594, 8
      %s596 = scalar_lea.vmem %s18, %s595
      %s597 = smul.u32 2, %s30
      %v598 = vld [vmem:[%s583] sm:$0xff]
      %v599 = vld [vmem:[%s583 + $0x8] sm:$0xff]
      %v600 = vld [vmem:[%s583 + $0x10] sm:$0xff]
      %v601 = vld [vmem:[%s583 + $0x18] sm:$0xff]
      %v602 = vld [vmem:[%s583 + $0x20] sm:$0xff]
      %v603 = vld [vmem:[%s583 + $0x28] sm:$0xff]
      %v604 = vld [vmem:[%s583 + $0x30] sm:$0xff]
      %v605 = vld [vmem:[%s583 + $0x38] sm:$0xff]
      %v606 = vld [vmem:[%s583 + $0x40] sm:$0xff]
      %v607 = vld [vmem:[%s583 + $0x48] sm:$0xff]
      %v608 = vld [vmem:[%s583 + $0x50] sm:$0xff]
      %v609 = vld [vmem:[%s583 + $0x58] sm:$0xff]
      %v610 = vld [vmem:[%s583 + $0x60] sm:$0xff]
      %v611 = vld [vmem:[%s583 + $0x68] sm:$0xff]
      %v612 = vld [vmem:[%s1] sm:$0xff]
      %v613 = vld [vmem:[%s1 + $0x8] sm:$0xff]
      %v614 = vld [vmem:[%s1 + $0x10] sm:$0xff]
      %v615 = vld [vmem:[%s1 + $0x18] sm:$0xff]
      %v616 = vld [vmem:[%s1 + $0x20] sm:$0xff]
      %v617 = vld [vmem:[%s1 + $0x28] sm:$0xff]
      %v618 = vld [vmem:[%s1 + $0x30] sm:$0xff]
      %v619 = vld [vmem:[%s1 + $0x38] sm:$0xff]
      %v620 = vld [vmem:[%s1 + $0x40] sm:$0xff]
      %v621 = vld [vmem:[%s1 + $0x48] sm:$0xff]
      %v622 = vld [vmem:[%s1 + $0x50] sm:$0xff]
      %v623 = vld [vmem:[%s1 + $0x58] sm:$0xff]
      %v624 = vld [vmem:[%s1 + $0x60] sm:$0xff]
      %v625 = vld [vmem:[%s1 + $0x68] sm:$0xff]
      %v626 = vld [vmem:[%s1 + $0x70] sm:$0xff]
      %v627 = vld [vmem:[%s1 + $0x78] sm:$0xff]
      %v628 = vld [vmem:[%s1 + $0x80] sm:$0xff]
      %v629 = vld [vmem:[%s1 + $0x88] sm:$0xff]
      %v630 = vld [vmem:[%s1 + $0x90] sm:$0xff]
      %v631 = vld [vmem:[%s1 + $0x98] sm:$0xff]
      %v632 = vld [vmem:[%s1 + $0xa0] sm:$0xff]
      %v633 = vld [vmem:[%s1 + $0xa8] sm:$0xff]
      %v634 = vld [vmem:[%s1 + $0xb0] sm:$0xff]
      %v635 = vld [vmem:[%s1 + $0xb8] sm:$0xff]
      %v636 = vld [vmem:[%s1 + $0xc0] sm:$0xff]
      %v637 = vld [vmem:[%s1 + $0xc8] sm:$0xff]
      %v638 = vld [vmem:[%s1 + $0xd0] sm:$0xff]
      %v639 = vld [vmem:[%s1 + $0xd8] sm:$0xff]
      %v640 = vld [vmem:[%s1 + $0xe0] sm:$0xff]
      %v641 = vld [vmem:[%s1 + $0xe8] sm:$0xff]
      %v642 = vld [vmem:[%s1 + $0xf0] sm:$0xff]
      %v643 = vld [vmem:[%s1 + $0xf8] sm:$0xff]
      %v644 = vld [vmem:[%s1 + $0x100] sm:$0xff]
      %v645 = vld [vmem:[%s1 + $0x108] sm:$0xff]
      %v646 = vld [vmem:[%s1 + $0x110] sm:$0xff]
      %v647 = vld [vmem:[%s1 + $0x118] sm:$0xff]
      %v648 = vld [vmem:[%s1 + $0x120] sm:$0xff]
      %v649 = vld [vmem:[%s1 + $0x128] sm:$0xff]
      %v650 = vld [vmem:[%s1 + $0x130] sm:$0xff]
      %v651 = vld [vmem:[%s1 + $0x138] sm:$0xff]
      %v652 = vld [vmem:[%s1 + $0x140] sm:$0xff]
      %v653 = vld [vmem:[%s1 + $0x148] sm:$0xff]
      %v654 = vld [vmem:[%s1 + $0x150] sm:$0xff]
      %v655 = vld [vmem:[%s1 + $0x158] sm:$0xff]
      %v656 = vld [vmem:[%s1 + $0x160] sm:$0xff]
      %v657 = vld [vmem:[%s1 + $0x168] sm:$0xff]
      %v658 = vld [vmem:[%s1 + $0x170] sm:$0xff]
      %v659 = vld [vmem:[%s1 + $0x178] sm:$0xff]
      %v660 = vld [vmem:[%s1 + $0x180] sm:$0xff]
      %v661 = vld [vmem:[%s1 + $0x188] sm:$0xff]
      %v662 = vld [vmem:[%s1 + $0x190] sm:$0xff]
      %v663 = vld [vmem:[%s1 + $0x198] sm:$0xff]
      %v664 = vld [vmem:[%s1 + $0x1a0] sm:$0xff]
      %v665 = vld [vmem:[%s1 + $0x1a8] sm:$0xff]
      %v666 = vld [vmem:[%s1 + $0x1b0] sm:$0xff]
      %v667 = vld [vmem:[%s1 + $0x1b8] sm:$0xff]
      %v668 = vld [vmem:[%s1 + $0x1c0] sm:$0xff]
      %v669 = vld [vmem:[%s1 + $0x1c8] sm:$0xff]
      %v670 = vld [vmem:[%s1 + $0x1d0] sm:$0xff]
      %v671 = vld [vmem:[%s1 + $0x1d8] sm:$0xff]
      %v672 = vld [vmem:[%s1 + $0x1e0] sm:$0xff]
      %v673 = vld [vmem:[%s1 + $0x1e8] sm:$0xff]
      %v674 = vld [vmem:[%s1 + $0x1f0] sm:$0xff]
      %v675 = vld [vmem:[%s1 + $0x1f8] sm:$0xff]
      %v676 = vld [vmem:[%s1 + $0x200] sm:$0xff]
      %v677 = vld [vmem:[%s1 + $0x208] sm:$0xff]
      %v678 = vld [vmem:[%s1 + $0x210] sm:$0xff]
      %v679 = vld [vmem:[%s1 + $0x218] sm:$0xff]
      %v680 = vld [vmem:[%s1 + $0x220] sm:$0xff]
      %v681 = vld [vmem:[%s1 + $0x228] sm:$0xff]
      %v682 = vld [vmem:[%s1 + $0x230] sm:$0xff]
      %v683 = vld [vmem:[%s1 + $0x238] sm:$0xff]
      %v684 = vld [vmem:[%s1 + $0x240] sm:$0xff]
      %v685 = vld [vmem:[%s1 + $0x248] sm:$0xff]
      %v686 = vld [vmem:[%s1 + $0x250] sm:$0xff]
      %v687 = vld [vmem:[%s1 + $0x258] sm:$0xff]
      %v688 = vld [vmem:[%s1 + $0x260] sm:$0xff]
      %v689 = vld [vmem:[%s1 + $0x268] sm:$0xff]
      %v690 = vld [vmem:[%s1 + $0x270] sm:$0xff]
      %v691 = vld [vmem:[%s1 + $0x278] sm:$0xff]
      %v692 = vld [vmem:[%s1 + $0x280] sm:$0xff]
      %v693 = vld [vmem:[%s1 + $0x288] sm:$0xff]
      %v694 = vld [vmem:[%s1 + $0x290] sm:$0xff]
      %v695 = vld [vmem:[%s1 + $0x298] sm:$0xff]
      %v696 = vld [vmem:[%s1 + $0x2a0] sm:$0xff]
      %v697 = vld [vmem:[%s1 + $0x2a8] sm:$0xff]
      %v698 = vld [vmem:[%s1 + $0x2b0] sm:$0xff]
      %v699 = vld [vmem:[%s1 + $0x2b8] sm:$0xff]
      %v700 = vld [vmem:[%s1 + $0x2c0] sm:$0xff]
      %v701 = vld [vmem:[%s1 + $0x2c8] sm:$0xff]
      %v702 = vld [vmem:[%s1 + $0x2d0] sm:$0xff]
      %v703 = vld [vmem:[%s1 + $0x2d8] sm:$0xff]
      %v704 = vld [vmem:[%s1 + $0x2e0] sm:$0xff]
      %v705 = vld [vmem:[%s1 + $0x2e8] sm:$0xff]
      %v706 = vld [vmem:[%s1 + $0x2f0] sm:$0xff]
      %v707 = vld [vmem:[%s1 + $0x2f8] sm:$0xff]
      %v708 = vld [vmem:[%s1 + $0x300] sm:$0xff]
      %v709 = vld [vmem:[%s1 + $0x308] sm:$0xff]
      %v710 = vld [vmem:[%s2] sm:$0x1]
      %v712 = vperm.slane %v710, 0
      %vm714 = vcmask 130048
      %v716 = vsel %vm714, %v604, 0
      %v719 = vsel %vm714, %v611, 0
      %721 = vmatpush.msra.mxu0 %v627
      %722 = vmatpush.msra.mxu0 %v626
      %723 = vmatpush.msra.mxu0 %v625
      %724 = vmatpush.msra.mxu0 %v624
      %725 = vmatpush.msra.mxu0 %v623
      %726 = vmatpush.msra.mxu0 %v622
      %727 = vmatpush.msra.mxu0 %v621
      %728 = vmatpush.msra.mxu0 %v620
      %729 = vmatpush.msra.mxu0 %v619
      %730 = vmatpush.msra.mxu0 %v618
      %731 = vmatpush.msra.mxu0 %v617
      %732 = vmatpush.msra.mxu0 %v616
      %733 = vmatpush.msra.mxu0 %v615
      %734 = vmatpush.msra.mxu0 %v614
      %735 = vmatpush.msra.mxu0 %v613
      %736 = vmatpush.msra.mxu0 %v612
      %737 = vmatmul.f32.gmra.mxu0 %v598
      %v738 = vpop.f32.mrf.mxu0
      %v739 = vadd.f32 %v712, %v738
      %740 = vmatmul.f32.gmra.mxu0 %v605
      %v741 = vpop.f32.mrf.mxu0
      %v742 = vadd.f32 %v712, %v741
      %743 = vdwg.mxu0
      %744 = vmatpush.msra.mxu0 %v643
      %745 = vmatpush.msra.mxu0 %v642
      %746 = vmatpush.msra.mxu0 %v641
      %747 = vmatpush.msra.mxu0 %v640
      %748 = vmatpush.msra.mxu0 %v639
      %749 = vmatpush.msra.mxu0 %v638
      %750 = vmatpush.msra.mxu0 %v637
      %751 = vmatpush.msra.mxu0 %v636
      %752 = vmatpush.msra.mxu0 %v635
      %753 = vmatpush.msra.mxu0 %v634
      %754 = vmatpush.msra.mxu0 %v633
      %755 = vmatpush.msra.mxu0 %v632
      %756 = vmatpush.msra.mxu0 %v631
      %757 = vmatpush.msra.mxu0 %v630
      %758 = vmatpush.msra.mxu0 %v629
      %759 = vmatpush.msra.mxu0 %v628
      %760 = vmatmul.f32.gmra.mxu0 %v599
      %v761 = vpop.f32.mrf.mxu0
      %v762 = vadd.f32 %v739, %v761
      %763 = vmatmul.f32.gmra.mxu0 %v606
      %v764 = vpop.f32.mrf.mxu0
      %v765 = vadd.f32 %v742, %v764
      %766 = vdwg.mxu0
      %767 = vmatpush.msra.mxu0 %v659
      %768 = vmatpush.msra.mxu0 %v658
      %769 = vmatpush.msra.mxu0 %v657
      %770 = vmatpush.msra.mxu0 %v656
      %771 = vmatpush.msra.mxu0 %v655
      %772 = vmatpush.msra.mxu0 %v654
      %773 = vmatpush.msra.mxu0 %v653
      %774 = vmatpush.msra.mxu0 %v652
      %775 = vmatpush.msra.mxu0 %v651
      %776 = vmatpush.msra.mxu0 %v650
      %777 = vmatpush.msra.mxu0 %v649
      %778 = vmatpush.msra.mxu0 %v648
      %779 = vmatpush.msra.mxu0 %v647
      %780 = vmatpush.msra.mxu0 %v646
      %781 = vmatpush.msra.mxu0 %v645
      %782 = vmatpush.msra.mxu0 %v644
      %783 = vmatmul.f32.gmra.mxu0 %v600
      %v784 = vpop.f32.mrf.mxu0
      %v785 = vadd.f32 %v762, %v784
      %786 = vmatmul.f32.gmra.mxu0 %v607
      %v787 = vpop.f32.mrf.mxu0
      %v788 = vadd.f32 %v765, %v787
      %789 = vdwg.mxu0
      %790 = vmatpush.msra.mxu0 %v675
      %791 = vmatpush.msra.mxu0 %v674
      %792 = vmatpush.msra.mxu0 %v673
      %793 = vmatpush.msra.mxu0 %v672
      %794 = vmatpush.msra.mxu0 %v671
      %795 = vmatpush.msra.mxu0 %v670
      %796 = vmatpush.msra.mxu0 %v669
      %797 = vmatpush.msra.mxu0 %v668
      %798 = vmatpush.msra.mxu0 %v667
      %799 = vmatpush.msra.mxu0 %v666
      %800 = vmatpush.msra.mxu0 %v665
      %801 = vmatpush.msra.mxu0 %v664
      %802 = vmatpush.msra.mxu0 %v663
      %803 = vmatpush.msra.mxu0 %v662
      %804 = vmatpush.msra.mxu0 %v661
      %805 = vmatpush.msra.mxu0 %v660
      %806 = vmatmul.f32.gmra.mxu0 %v601
      %v807 = vpop.f32.mrf.mxu0
      %v808 = vadd.f32 %v785, %v807
      %809 = vmatmul.f32.gmra.mxu0 %v608
      %v810 = vpop.f32.mrf.mxu0
      %v811 = vadd.f32 %v788, %v810
      %812 = vdwg.mxu0
      %813 = vmatpush.msra.mxu0 %v691
      %814 = vmatpush.msra.mxu0 %v690
      %815 = vmatpush.msra.mxu0 %v689
      %816 = vmatpush.msra.mxu0 %v688
      %817 = vmatpush.msra.mxu0 %v687
      %818 = vmatpush.msra.mxu0 %v686
      %819 = vmatpush.msra.mxu0 %v685
      %820 = vmatpush.msra.mxu0 %v684
      %821 = vmatpush.msra.mxu0 %v683
      %822 = vmatpush.msra.mxu0 %v682
      %823 = vmatpush.msra.mxu0 %v681
      %824 = vmatpush.msra.mxu0 %v680
      %825 = vmatpush.msra.mxu0 %v679
      %826 = vmatpush.msra.mxu0 %v678
      %827 = vmatpush.msra.mxu0 %v677
      %828 = vmatpush.msra.mxu0 %v676
      %829 = vmatmul.f32.gmra.mxu0 %v602
      %v830 = vpop.f32.mrf.mxu0
      %v831 = vadd.f32 %v808, %v830
      %832 = vmatmul.f32.gmra.mxu0 %v609
      %v833 = vpop.f32.mrf.mxu0
      %v834 = vadd.f32 %v811, %v833
      %835 = vdwg.mxu0
      %836 = vmatpush.msra.mxu0 %v707
      %837 = vmatpush.msra.mxu0 %v706
      %838 = vmatpush.msra.mxu0 %v705
      %839 = vmatpush.msra.mxu0 %v704
      %840 = vmatpush.msra.mxu0 %v703
      %841 = vmatpush.msra.mxu0 %v702
      %842 = vmatpush.msra.mxu0 %v701
      %843 = vmatpush.msra.mxu0 %v700
      %844 = vmatpush.msra.mxu0 %v699
      %845 = vmatpush.msra.mxu0 %v698
      %846 = vmatpush.msra.mxu0 %v697
      %847 = vmatpush.msra.mxu0 %v696
      %848 = vmatpush.msra.mxu0 %v695
      %849 = vmatpush.msra.mxu0 %v694
      %850 = vmatpush.msra.mxu0 %v693
      %851 = vmatpush.msra.mxu0 %v692
      %852 = vmatmul.f32.gmra.mxu0 %v603
      %v853 = vpop.f32.mrf.mxu0
      %v854 = vadd.f32 %v831, %v853
      %855 = vmatmul.f32.gmra.mxu0 %v610
      %v856 = vpop.f32.mrf.mxu0
      %v857 = vadd.f32 %v834, %v856
      %858 = vdwg.mxu0
      %859 = vmatpush.msra.mxu0 0.0
      %860 = vmatpush.msra.mxu0 0.0
      %861 = vmatpush.msra.mxu0 0.0
      %862 = vmatpush.msra.mxu0 0.0
      %863 = vmatpush.msra.mxu0 0.0
      %864 = vmatpush.msra.mxu0 0.0
      %865 = vmatpush.msra.mxu0 0.0
      %866 = vmatpush.msra.mxu0 0.0
      %867 = vmatpush.msra.mxu0 0.0
      %868 = vmatpush.msra.mxu0 0.0
      %869 = vmatpush.msra.mxu0 0.0
      %870 = vmatpush.msra.mxu0 0.0
      %871 = vmatpush.msra.mxu0 0.0
      %872 = vmatpush.msra.mxu0 0.0
      %873 = vmatpush.msra.mxu0 %v709
      %874 = vmatpush.msra.mxu0 %v708
      %875 = vmatmul.f32.gmra.mxu0 %v716
      %v876 = vpop.f32.mrf.mxu0
      %v877 = vadd.f32 %v854, %v876
      %878 = vmatmul.f32.gmra.mxu0 %v719
      %v879 = vpop.f32.mrf.mxu0
      %v880 = vadd.f32 %v857, %v879
      %881 = vdwg.mxu0
      %v882 = vtanh.pop %v877
      %v883 = vtanh.pop %v880
      %v884 = vld [vmem:[%s3] sm:$0xff]
      %v885 = vld [vmem:[%s3 + $0x8] sm:$0xff]
      %v886 = vld [vmem:[%s3 + $0x10] sm:$0xff]
      %v887 = vld [vmem:[%s3 + $0x18] sm:$0xff]
      %v888 = vld [vmem:[%s3 + $0x20] sm:$0xff]
      %v889 = vld [vmem:[%s3 + $0x28] sm:$0xff]
      %v890 = vld [vmem:[%s3 + $0x30] sm:$0xff]
      %v891 = vld [vmem:[%s3 + $0x38] sm:$0xff]
      %v892 = vld [vmem:[%s3 + $0x40] sm:$0xff]
      %v893 = vld [vmem:[%s3 + $0x48] sm:$0xff]
      %v894 = vld [vmem:[%s3 + $0x50] sm:$0xff]
      %v895 = vld [vmem:[%s3 + $0x58] sm:$0xff]
      %v896 = vld [vmem:[%s3 + $0x60] sm:$0xff]
      %v897 = vld [vmem:[%s3 + $0x68] sm:$0xff]
      %v898 = vld [vmem:[%s3 + $0x70] sm:$0xff]
      %v899 = vld [vmem:[%s3 + $0x78] sm:$0xff]
      %v900 = vld [vmem:[%s4] sm:$0x1]
      %v902 = vperm.slane %v900, 0
      %904 = vmatpush.msra.mxu0 %v899
      %905 = vmatpush.msra.mxu0 %v898
      %906 = vmatpush.msra.mxu0 %v897
      %907 = vmatpush.msra.mxu0 %v896
      %908 = vmatpush.msra.mxu0 %v895
      %909 = vmatpush.msra.mxu0 %v894
      %910 = vmatpush.msra.mxu0 %v893
      %911 = vmatpush.msra.mxu0 %v892
      %912 = vmatpush.msra.mxu0 %v891
      %913 = vmatpush.msra.mxu0 %v890
      %914 = vmatpush.msra.mxu0 %v889
      %915 = vmatpush.msra.mxu0 %v888
      %916 = vmatpush.msra.mxu0 %v887
      %917 = vmatpush.msra.mxu0 %v886
      %918 = vmatpush.msra.mxu0 %v885
      %919 = vmatpush.msra.mxu0 %v884
      %920 = vmatmul.f32.gmra.mxu0 %v882
      %v921 = vpop.f32.mrf.mxu0
      %v922 = vadd.f32 %v902, %v921
      %923 = vmatmul.f32.gmra.mxu0 %v883
      %v924 = vpop.f32.mrf.mxu0
      %v925 = vadd.f32 %v902, %v924
      %926 = vdwg.mxu0
      %v927 = vtanh.pop %v922
      %v928 = vtanh.pop %v925
      %v929 = vld [vmem:[%s5] sm:$0xff]
      %v930 = vld [vmem:[%s5 + $0x8] sm:$0xff]
      %v931 = vld [vmem:[%s5 + $0x10] sm:$0xff]
      %v932 = vld [vmem:[%s5 + $0x18] sm:$0xff]
      %v933 = vld [vmem:[%s5 + $0x20] sm:$0xff]
      %v934 = vld [vmem:[%s5 + $0x28] sm:$0xff]
      %v935 = vld [vmem:[%s5 + $0x30] sm:$0xff]
      %v936 = vld [vmem:[%s5 + $0x38] sm:$0xff]
      %v937 = vld [vmem:[%s6] sm:$0x1]
      %v939 = vperm.slane %v937, 0
      %vm941 = vcmask 523264
      %v943 = vsel %vm941, %v927, 0
      %v946 = vsel %vm941, %v928, 0
      %948 = vmatpush.msra.mxu0 0.0
      %949 = vmatpush.msra.mxu0 0.0
      %950 = vmatpush.msra.mxu0 0.0
      %951 = vmatpush.msra.mxu0 0.0
      %952 = vmatpush.msra.mxu0 0.0
      %953 = vmatpush.msra.mxu0 0.0
      %954 = vmatpush.msra.mxu0 0.0
      %955 = vmatpush.msra.mxu0 0.0
      %956 = vmatpush.msra.mxu0 %v936
      %957 = vmatpush.msra.mxu0 %v935
      %958 = vmatpush.msra.mxu0 %v934
      %959 = vmatpush.msra.mxu0 %v933
      %960 = vmatpush.msra.mxu0 %v932
      %961 = vmatpush.msra.mxu0 %v931
      %962 = vmatpush.msra.mxu0 %v930
      %963 = vmatpush.msra.mxu0 %v929
      %964 = vmatmul.f32.gmra.mxu0 %v943
      %v965 = vpop.f32.mrf.mxu0
      %v966 = vadd.f32 %v939, %v965
      %967 = vmatmul.f32.gmra.mxu0 %v946
      %v968 = vpop.f32.mrf.mxu0
      %v969 = vadd.f32 %v939, %v968
      %970 = vdwg.mxu0
      %v971 = vtanh.pop %v966
      %v972 = vtanh.pop %v969
      %v973 = vld [vmem:[%s7] sm:$0xff]
      %v974 = vld [vmem:[%s7 + $0x8] sm:$0xf]
      %v975 = vld [vmem:[%s8] sm:$0x1]
      %v977 = vperm.slane %v975, 0
      %vm979 = vcmask 97280
      %v981 = vsel %vm979, %v971, 0
      %v984 = vsel %vm979, %v972, 0
      %vm986 = vcmask 1043456
      %v988 = vsel %vm986, %v974, 0
      %990 = vmatpush.msra.mxu0 0.0
      %991 = vmatpush.msra.mxu0 0.0
      %992 = vmatpush.msra.mxu0 0.0
      %993 = vmatpush.msra.mxu0 0.0
      %994 = vmatpush.msra.mxu0 0.0
      %995 = vmatpush.msra.mxu0 0.0
      %996 = vmatpush.msra.mxu0 0.0
      %997 = vmatpush.msra.mxu0 0.0
      %998 = vmatpush.msra.mxu0 0.0
      %999 = vmatpush.msra.mxu0 0.0
      %1000 = vmatpush.msra.mxu0 0.0
      %1001 = vmatpush.msra.mxu0 0.0
      %1002 = vmatpush.msra.mxu0 0.0
      %1003 = vmatpush.msra.mxu0 0.0
      %1004 = vmatpush.msra.mxu0 %v988
      %1005 = vmatpush.msra.mxu0 %v973
      %1006 = vmatmul.f32.gmra.mxu0 %v981
      %v1007 = vpop.f32.mrf.mxu0
      %v1008 = vadd.f32 %v977, %v1007
      %1009 = vmatmul.f32.gmra.mxu0 %v984
      %v1010 = vpop.f32.mrf.mxu0
      %v1011 = vadd.f32 %v977, %v1010
      %1012 = vdwg.mxu0
      %1013 = vst [vmem:[%s589] sm:$0xff] %v1008
      %1014 = vst [vmem:[%s589 + $0x8] sm:$0xff] %v1011
      %v1015 = vld [vmem:[%s9] sm:$0xff]
      %v1016 = vld [vmem:[%s9 + $0x8] sm:$0xf]
      %v1017 = vld [vmem:[%s10] sm:$0x1]
      %v1019 = vperm.slane %v1017, 0
      %v1022 = vsel %vm986, %v1016, 0
      %1024 = vmatpush.msra.mxu0 0.0
      %1025 = vmatpush.msra.mxu0 0.0
      %1026 = vmatpush.msra.mxu0 0.0
      %1027 = vmatpush.msra.mxu0 0.0
      %1028 = vmatpush.msra.mxu0 0.0
      %1029 = vmatpush.msra.mxu0 0.0
      %1030 = vmatpush.msra.mxu0 0.0
      %1031 = vmatpush.msra.mxu0 0.0
      %1032 = vmatpush.msra.mxu0 0.0
      %1033 = vmatpush.msra.mxu0 0.0
      %1034 = vmatpush.msra.mxu0 0.0
      %1035 = vmatpush.msra.mxu0 0.0
      %1036 = vmatpush.msra.mxu0 0.0
      %1037 = vmatpush.msra.mxu0 0.0
      %1038 = vmatpush.msra.mxu0 %v1022
      %1039 = vmatpush.msra.mxu0 %v1015
      %1040 = vmatmul.f32.gmra.mxu0 %v981
      %v1041 = vpop.f32.mrf.mxu0
      %v1042 = vadd.f32 %v1019, %v1041
      %1043 = vmatmul.f32.gmra.mxu0 %v984
      %v1044 = vpop.f32.mrf.mxu0
      %v1045 = vadd.f32 %v1019, %v1044
      %1046 = vdwg.mxu0
      %v1047 = vtanh.pop %v1042
      %v1048 = vtanh.pop %v1045
      %v1049 = vld [vmem:[%s11] sm:$0xff]
      %v1050 = vld [vmem:[%s11 + $0x8] sm:$0xf]
      %v1051 = vld [vmem:[%s12] sm:$0x1]
      %v1053 = vperm.slane %v1051, 0
      %v1056 = vsel %vm979, %v1047, 0
      %v1059 = vsel %vm979, %v1048, 0
      %v1062 = vsel %vm986, %v1050, 0
      %1064 = vmatpush.msra.mxu0 0.0
      %1065 = vmatpush.msra.mxu0 0.0
      %1066 = vmatpush.msra.mxu0 0.0
      %1067 = vmatpush.msra.mxu0 0.0
      %1068 = vmatpush.msra.mxu0 0.0
      %1069 = vmatpush.msra.mxu0 0.0
      %1070 = vmatpush.msra.mxu0 0.0
      %1071 = vmatpush.msra.mxu0 0.0
      %1072 = vmatpush.msra.mxu0 0.0
      %1073 = vmatpush.msra.mxu0 0.0
      %1074 = vmatpush.msra.mxu0 0.0
      %1075 = vmatpush.msra.mxu0 0.0
      %1076 = vmatpush.msra.mxu0 0.0
      %1077 = vmatpush.msra.mxu0 0.0
      %1078 = vmatpush.msra.mxu0 %v1062
      %1079 = vmatpush.msra.mxu0 %v1049
      %1080 = vmatmul.f32.gmra.mxu0 %v1056
      %v1081 = vpop.f32.mrf.mxu0
      %v1082 = vadd.f32 %v1053, %v1081
      %1083 = vmatmul.f32.gmra.mxu0 %v1059
      %v1084 = vpop.f32.mrf.mxu0
      %v1085 = vadd.f32 %v1053, %v1084
      %1086 = vdwg.mxu0
      %v1087 = vtanh.pop %v1082
      %v1088 = vtanh.pop %v1085
      %v1089 = vld [vmem:[%s13] sm:$0xff]
      %v1090 = vld [vmem:[%s13 + $0x8] sm:$0xff]
      %v1091 = vld [vmem:[%s13 + $0x10] sm:$0xff]
      %v1092 = vld [vmem:[%s13 + $0x18] sm:$0xff]
      %v1093 = vld [vmem:[%s13 + $0x20] sm:$0xff]
      %v1094 = vld [vmem:[%s13 + $0x28] sm:$0xff]
      %v1095 = vld [vmem:[%s13 + $0x30] sm:$0xff]
      %v1096 = vld [vmem:[%s13 + $0x38] sm:$0xff]
      %v1097 = vld [vmem:[%s14] sm:$0x1]
      %v1099 = vperm.slane %v1097, 0
      %v1102 = vsel %vm941, %v1087, 0
      %v1105 = vsel %vm941, %v1088, 0
      %1107 = vmatpush.msra.mxu0 0.0
      %1108 = vmatpush.msra.mxu0 0.0
      %1109 = vmatpush.msra.mxu0 0.0
      %1110 = vmatpush.msra.mxu0 0.0
      %1111 = vmatpush.msra.mxu0 0.0
      %1112 = vmatpush.msra.mxu0 0.0
      %1113 = vmatpush.msra.mxu0 0.0
      %1114 = vmatpush.msra.mxu0 0.0
      %1115 = vmatpush.msra.mxu0 %v1096
      %1116 = vmatpush.msra.mxu0 %v1095
      %1117 = vmatpush.msra.mxu0 %v1094
      %1118 = vmatpush.msra.mxu0 %v1093
      %1119 = vmatpush.msra.mxu0 %v1092
      %1120 = vmatpush.msra.mxu0 %v1091
      %1121 = vmatpush.msra.mxu0 %v1090
      %1122 = vmatpush.msra.mxu0 %v1089
      %1123 = vmatmul.f32.gmra.mxu0 %v1102
      %v1124 = vpop.f32.mrf.mxu0
      %v1125 = vadd.f32 %v1099, %v1124
      %1126 = vmatmul.f32.gmra.mxu0 %v1105
      %v1127 = vpop.f32.mrf.mxu0
      %v1128 = vadd.f32 %v1099, %v1127
      %1129 = vdwg.mxu0
      %v1130 = vtanh.pop %v1125
      %v1131 = vtanh.pop %v1128
      %v1132 = vld [vmem:[%s15] sm:$0xff]
      %v1133 = vld [vmem:[%s15 + $0x8] sm:$0xff]
      %v1134 = vld [vmem:[%s15 + $0x10] sm:$0xff]
      %v1135 = vld [vmem:[%s15 + $0x18] sm:$0xff]
      %v1136 = vld [vmem:[%s15 + $0x20] sm:$0xff]
      %v1137 = vld [vmem:[%s15 + $0x28] sm:$0xff]
      %v1138 = vld [vmem:[%s15 + $0x30] sm:$0xff]
      %v1139 = vld [vmem:[%s15 + $0x38] sm:$0xff]
      %v1140 = vld [vmem:[%s15 + $0x40] sm:$0xff]
      %v1141 = vld [vmem:[%s15 + $0x48] sm:$0xff]
      %v1142 = vld [vmem:[%s15 + $0x50] sm:$0xff]
      %v1143 = vld [vmem:[%s15 + $0x58] sm:$0xff]
      %v1144 = vld [vmem:[%s15 + $0x60] sm:$0xff]
      %v1145 = vld [vmem:[%s15 + $0x68] sm:$0xff]
      %v1146 = vld [vmem:[%s15 + $0x70] sm:$0xff]
      %v1147 = vld [vmem:[%s15 + $0x78] sm:$0xff]
      %v1148 = vld [vmem:[%s15 + $0x80] sm:$0xff]
      %v1149 = vld [vmem:[%s15 + $0x88] sm:$0xff]
      %v1150 = vld [vmem:[%s15 + $0x90] sm:$0xff]
      %v1151 = vld [vmem:[%s15 + $0x98] sm:$0xff]
      %v1152 = vld [vmem:[%s15 + $0xa0] sm:$0xff]
      %v1153 = vld [vmem:[%s15 + $0xa8] sm:$0xff]
      %v1154 = vld [vmem:[%s15 + $0xb0] sm:$0xff]
      %v1155 = vld [vmem:[%s15 + $0xb8] sm:$0xff]
      %v1156 = vld [vmem:[%s15 + $0xc0] sm:$0xff]
      %v1157 = vld [vmem:[%s15 + $0xc8] sm:$0xff]
      %v1158 = vld [vmem:[%s15 + $0xd0] sm:$0xff]
      %v1159 = vld [vmem:[%s15 + $0xd8] sm:$0xff]
      %v1160 = vld [vmem:[%s15 + $0xe0] sm:$0xff]
      %v1161 = vld [vmem:[%s15 + $0xe8] sm:$0xff]
      %v1162 = vld [vmem:[%s15 + $0xf0] sm:$0xff]
      %v1163 = vld [vmem:[%s15 + $0xf8] sm:$0xff]
      %v1164 = vld [vmem:[%s15 + $0x100] sm:$0xff]
      %v1165 = vld [vmem:[%s15 + $0x108] sm:$0xff]
      %v1166 = vld [vmem:[%s15 + $0x110] sm:$0xff]
      %v1167 = vld [vmem:[%s15 + $0x118] sm:$0xff]
      %v1168 = vld [vmem:[%s15 + $0x120] sm:$0xff]
      %v1169 = vld [vmem:[%s15 + $0x128] sm:$0xff]
      %v1170 = vld [vmem:[%s15 + $0x130] sm:$0xff]
      %v1171 = vld [vmem:[%s15 + $0x138] sm:$0xff]
      %v1172 = vld [vmem:[%s15 + $0x140] sm:$0xff]
      %v1173 = vld [vmem:[%s15 + $0x148] sm:$0xff]
      %v1174 = vld [vmem:[%s15 + $0x150] sm:$0xff]
      %v1175 = vld [vmem:[%s15 + $0x158] sm:$0xff]
      %v1176 = vld [vmem:[%s15 + $0x160] sm:$0xff]
      %v1177 = vld [vmem:[%s15 + $0x168] sm:$0xff]
      %v1178 = vld [vmem:[%s15 + $0x170] sm:$0xff]
      %v1179 = vld [vmem:[%s15 + $0x178] sm:$0xff]
      %v1180 = vld [vmem:[%s15 + $0x180] sm:$0xff]
      %v1181 = vld [vmem:[%s15 + $0x188] sm:$0xff]
      %v1182 = vld [vmem:[%s15 + $0x190] sm:$0xff]
      %v1183 = vld [vmem:[%s15 + $0x198] sm:$0xff]
      %v1184 = vld [vmem:[%s15 + $0x1a0] sm:$0xff]
      %v1185 = vld [vmem:[%s15 + $0x1a8] sm:$0xff]
      %v1186 = vld [vmem:[%s15 + $0x1b0] sm:$0xff]
      %v1187 = vld [vmem:[%s15 + $0x1b8] sm:$0xff]
      %v1188 = vld [vmem:[%s15 + $0x1c0] sm:$0xff]
      %v1189 = vld [vmem:[%s15 + $0x1c8] sm:$0xff]
      %v1190 = vld [vmem:[%s15 + $0x1d0] sm:$0xff]
      %v1191 = vld [vmem:[%s15 + $0x1d8] sm:$0xff]
      %v1192 = vld [vmem:[%s15 + $0x1e0] sm:$0xff]
      %v1193 = vld [vmem:[%s15 + $0x1e8] sm:$0xff]
      %v1194 = vld [vmem:[%s15 + $0x1f0] sm:$0xff]
      %v1195 = vld [vmem:[%s15 + $0x1f8] sm:$0xff]
      %v1196 = vld [vmem:[%s15 + $0x200] sm:$0xff]
      %v1197 = vld [vmem:[%s15 + $0x208] sm:$0xff]
      %v1198 = vld [vmem:[%s15 + $0x210] sm:$0xff]
      %v1199 = vld [vmem:[%s15 + $0x218] sm:$0xff]
      %v1200 = vld [vmem:[%s15 + $0x220] sm:$0xff]
      %v1201 = vld [vmem:[%s15 + $0x228] sm:$0xff]
      %v1202 = vld [vmem:[%s15 + $0x230] sm:$0xff]
      %v1203 = vld [vmem:[%s15 + $0x238] sm:$0xff]
      %v1204 = vld [vmem:[%s15 + $0x240] sm:$0xff]
      %v1205 = vld [vmem:[%s15 + $0x248] sm:$0xff]
      %v1206 = vld [vmem:[%s15 + $0x250] sm:$0xff]
      %v1207 = vld [vmem:[%s15 + $0x258] sm:$0xff]
      %v1208 = vld [vmem:[%s15 + $0x260] sm:$0xff]
      %v1209 = vld [vmem:[%s15 + $0x268] sm:$0xff]
      %v1210 = vld [vmem:[%s15 + $0x270] sm:$0xff]
      %v1211 = vld [vmem:[%s15 + $0x278] sm:$0xff]
      %v1212 = vld [vmem:[%s15 + $0x280] sm:$0xff]
      %v1213 = vld [vmem:[%s15 + $0x288] sm:$0xff]
      %v1214 = vld [vmem:[%s15 + $0x290] sm:$0xff]
      %v1215 = vld [vmem:[%s15 + $0x298] sm:$0xff]
      %v1216 = vld [vmem:[%s15 + $0x2a0] sm:$0xff]
      %v1217 = vld [vmem:[%s15 + $0x2a8] sm:$0xff]
      %v1218 = vld [vmem:[%s15 + $0x2b0] sm:$0xff]
      %v1219 = vld [vmem:[%s15 + $0x2b8] sm:$0xff]
      %v1220 = vld [vmem:[%s15 + $0x2c0] sm:$0xff]
      %v1221 = vld [vmem:[%s15 + $0x2c8] sm:$0xff]
      %v1222 = vld [vmem:[%s15 + $0x2d0] sm:$0xff]
      %v1223 = vld [vmem:[%s15 + $0x2d8] sm:$0xff]
      %v1224 = vld [vmem:[%s15 + $0x2e0] sm:$0xff]
      %v1225 = vld [vmem:[%s15 + $0x2e8] sm:$0xff]
      %v1226 = vld [vmem:[%s15 + $0x2f0] sm:$0xff]
      %v1227 = vld [vmem:[%s15 + $0x2f8] sm:$0xff]
      %v1228 = vld [vmem:[%s15 + $0x300] sm:$0xff]
      %v1229 = vld [vmem:[%s15 + $0x308] sm:$0xff]
      %v1230 = vld [vmem:[%s15 + $0x310] sm:$0xff]
      %v1231 = vld [vmem:[%s15 + $0x318] sm:$0xff]
      %v1232 = vld [vmem:[%s15 + $0x320] sm:$0xff]
      %v1233 = vld [vmem:[%s15 + $0x328] sm:$0xff]
      %v1234 = vld [vmem:[%s15 + $0x330] sm:$0xff]
      %v1235 = vld [vmem:[%s15 + $0x338] sm:$0xff]
      %v1236 = vld [vmem:[%s15 + $0x340] sm:$0xff]
      %v1237 = vld [vmem:[%s15 + $0x348] sm:$0xff]
      %v1238 = vld [vmem:[%s15 + $0x350] sm:$0xff]
      %v1239 = vld [vmem:[%s15 + $0x358] sm:$0xff]
      %v1240 = vld [vmem:[%s15 + $0x360] sm:$0xff]
      %v1241 = vld [vmem:[%s15 + $0x368] sm:$0xff]
      %v1242 = vld [vmem:[%s15 + $0x370] sm:$0xff]
      %v1243 = vld [vmem:[%s15 + $0x378] sm:$0xff]
      %v1244 = vld [vmem:[%s16] sm:$0x7f]
      %v1246 = vperm.slane %v1244, 0
      %v1247 = vperm.slane %v1244, 1
      %v1248 = vperm.slane %v1244, 2
      %v1249 = vperm.slane %v1244, 3
      %v1250 = vperm.slane %v1244, 4
      %v1251 = vperm.slane %v1244, 5
      %v1252 = vperm.slane %v1244, 6
      %1260 = vmatpush.msra.mxu0 %v1237
      %1261 = vmatpush.msra.mxu0 %v1230
      %1262 = vmatpush.msra.mxu0 %v1223
      %1263 = vmatpush.msra.mxu0 %v1216
      %1264 = vmatpush.msra.mxu0 %v1209
      %1265 = vmatpush.msra.mxu0 %v1202
      %1266 = vmatpush.msra.mxu0 %v1195
      %1267 = vmatpush.msra.mxu0 %v1188
      %1268 = vmatpush.msra.mxu0 %v1181
      %1269 = vmatpush.msra.mxu0 %v1174
      %1270 = vmatpush.msra.mxu0 %v1167
      %1271 = vmatpush.msra.mxu0 %v1160
      %1272 = vmatpush.msra.mxu0 %v1153
      %1273 = vmatpush.msra.mxu0 %v1146
      %1274 = vmatpush.msra.mxu0 %v1139
      %1275 = vmatpush.msra.mxu0 %v1132
      %1276 = vmatmul.f32.gmra.mxu0 %v1130
      %v1277 = vpop.f32.mrf.mxu0
      %v1278 = vadd.f32 %v1246, %v1277
      %1279 = vmatmul.f32.gmra.mxu0 %v1131
      %v1280 = vpop.f32.mrf.mxu0
      %v1281 = vadd.f32 %v1246, %v1280
      %1282 = vdwg.mxu0
      %1283 = vmatpush.msra.mxu0 %v1238
      %1284 = vmatpush.msra.mxu0 %v1231
      %1285 = vmatpush.msra.mxu0 %v1224
      %1286 = vmatpush.msra.mxu0 %v1217
      %1287 = vmatpush.msra.mxu0 %v1210
      %1288 = vmatpush.msra.mxu0 %v1203
      %1289 = vmatpush.msra.mxu0 %v1196
      %1290 = vmatpush.msra.mxu0 %v1189
      %1291 = vmatpush.msra.mxu0 %v1182
      %1292 = vmatpush.msra.mxu0 %v1175
      %1293 = vmatpush.msra.mxu0 %v1168
      %1294 = vmatpush.msra.mxu0 %v1161
      %1295 = vmatpush.msra.mxu0 %v1154
      %1296 = vmatpush.msra.mxu0 %v1147
      %1297 = vmatpush.msra.mxu0 %v1140
      %1298 = vmatpush.msra.mxu0 %v1133
      %1299 = vmatmul.f32.gmra.mxu0 %v1130
      %v1300 = vpop.f32.mrf.mxu0
      %v1301 = vadd.f32 %v1247, %v1300
      %1302 = vmatmul.f32.gmra.mxu0 %v1131
      %v1303 = vpop.f32.mrf.mxu0
      %v1304 = vadd.f32 %v1247, %v1303
      %1305 = vdwg.mxu0
      %1306 = vmatpush.msra.mxu0 %v1239
      %1307 = vmatpush.msra.mxu0 %v1232
      %1308 = vmatpush.msra.mxu0 %v1225
      %1309 = vmatpush.msra.mxu0 %v1218
      %1310 = vmatpush.msra.mxu0 %v1211
      %1311 = vmatpush.msra.mxu0 %v1204
      %1312 = vmatpush.msra.mxu0 %v1197
      %1313 = vmatpush.msra.mxu0 %v1190
      %1314 = vmatpush.msra.mxu0 %v1183
      %1315 = vmatpush.msra.mxu0 %v1176
      %1316 = vmatpush.msra.mxu0 %v1169
      %1317 = vmatpush.msra.mxu0 %v1162
      %1318 = vmatpush.msra.mxu0 %v1155
      %1319 = vmatpush.msra.mxu0 %v1148
      %1320 = vmatpush.msra.mxu0 %v1141
      %1321 = vmatpush.msra.mxu0 %v1134
      %1322 = vmatmul.f32.gmra.mxu0 %v1130
      %v1323 = vpop.f32.mrf.mxu0
      %v1324 = vadd.f32 %v1248, %v1323
      %1325 = vmatmul.f32.gmra.mxu0 %v1131
      %v1326 = vpop.f32.mrf.mxu0
      %v1327 = vadd.f32 %v1248, %v1326
      %1328 = vdwg.mxu0
      %1329 = vmatpush.msra.mxu0 %v1240
      %1330 = vmatpush.msra.mxu0 %v1233
      %1331 = vmatpush.msra.mxu0 %v1226
      %1332 = vmatpush.msra.mxu0 %v1219
      %1333 = vmatpush.msra.mxu0 %v1212
      %1334 = vmatpush.msra.mxu0 %v1205
      %1335 = vmatpush.msra.mxu0 %v1198
      %1336 = vmatpush.msra.mxu0 %v1191
      %1337 = vmatpush.msra.mxu0 %v1184
      %1338 = vmatpush.msra.mxu0 %v1177
      %1339 = vmatpush.msra.mxu0 %v1170
      %1340 = vmatpush.msra.mxu0 %v1163
      %1341 = vmatpush.msra.mxu0 %v1156
      %1342 = vmatpush.msra.mxu0 %v1149
      %1343 = vmatpush.msra.mxu0 %v1142
      %1344 = vmatpush.msra.mxu0 %v1135
      %1345 = vmatmul.f32.gmra.mxu0 %v1130
      %v1346 = vpop.f32.mrf.mxu0
      %v1347 = vadd.f32 %v1249, %v1346
      %1348 = vmatmul.f32.gmra.mxu0 %v1131
      %v1349 = vpop.f32.mrf.mxu0
      %v1350 = vadd.f32 %v1249, %v1349
      %1351 = vdwg.mxu0
      %1352 = vmatpush.msra.mxu0 %v1241
      %1353 = vmatpush.msra.mxu0 %v1234
      %1354 = vmatpush.msra.mxu0 %v1227
      %1355 = vmatpush.msra.mxu0 %v1220
      %1356 = vmatpush.msra.mxu0 %v1213
      %1357 = vmatpush.msra.mxu0 %v1206
      %1358 = vmatpush.msra.mxu0 %v1199
      %1359 = vmatpush.msra.mxu0 %v1192
      %1360 = vmatpush.msra.mxu0 %v1185
      %1361 = vmatpush.msra.mxu0 %v1178
      %1362 = vmatpush.msra.mxu0 %v1171
      %1363 = vmatpush.msra.mxu0 %v1164
      %1364 = vmatpush.msra.mxu0 %v1157
      %1365 = vmatpush.msra.mxu0 %v1150
      %1366 = vmatpush.msra.mxu0 %v1143
      %1367 = vmatpush.msra.mxu0 %v1136
      %1368 = vmatmul.f32.gmra.mxu0 %v1130
      %v1369 = vpop.f32.mrf.mxu0
      %v1370 = vadd.f32 %v1250, %v1369
      %1371 = vmatmul.f32.gmra.mxu0 %v1131
      %v1372 = vpop.f32.mrf.mxu0
      %v1373 = vadd.f32 %v1250, %v1372
      %1374 = vdwg.mxu0
      %1375 = vmatpush.msra.mxu0 %v1242
      %1376 = vmatpush.msra.mxu0 %v1235
      %1377 = vmatpush.msra.mxu0 %v1228
      %1378 = vmatpush.msra.mxu0 %v1221
      %1379 = vmatpush.msra.mxu0 %v1214
      %1380 = vmatpush.msra.mxu0 %v1207
      %1381 = vmatpush.msra.mxu0 %v1200
      %1382 = vmatpush.msra.mxu0 %v1193
      %1383 = vmatpush.msra.mxu0 %v1186
      %1384 = vmatpush.msra.mxu0 %v1179
      %1385 = vmatpush.msra.mxu0 %v1172
      %1386 = vmatpush.msra.mxu0 %v1165
      %1387 = vmatpush.msra.mxu0 %v1158
      %1388 = vmatpush.msra.mxu0 %v1151
      %1389 = vmatpush.msra.mxu0 %v1144
      %1390 = vmatpush.msra.mxu0 %v1137
      %1391 = vmatmul.f32.gmra.mxu0 %v1130
      %v1392 = vpop.f32.mrf.mxu0
      %v1393 = vadd.f32 %v1251, %v1392
      %1394 = vmatmul.f32.gmra.mxu0 %v1131
      %v1395 = vpop.f32.mrf.mxu0
      %v1396 = vadd.f32 %v1251, %v1395
      %1397 = vdwg.mxu0
      %1398 = vmatpush.msra.mxu0 %v1243
      %1399 = vmatpush.msra.mxu0 %v1236
      %1400 = vmatpush.msra.mxu0 %v1229
      %1401 = vmatpush.msra.mxu0 %v1222
      %1402 = vmatpush.msra.mxu0 %v1215
      %1403 = vmatpush.msra.mxu0 %v1208
      %1404 = vmatpush.msra.mxu0 %v1201
      %1405 = vmatpush.msra.mxu0 %v1194
      %1406 = vmatpush.msra.mxu0 %v1187
      %1407 = vmatpush.msra.mxu0 %v1180
      %1408 = vmatpush.msra.mxu0 %v1173
      %1409 = vmatpush.msra.mxu0 %v1166
      %1410 = vmatpush.msra.mxu0 %v1159
      %1411 = vmatpush.msra.mxu0 %v1152
      %1412 = vmatpush.msra.mxu0 %v1145
      %1413 = vmatpush.msra.mxu0 %v1138
      %1414 = vmatmul.f32.gmra.mxu0 %v1130
      %v1415 = vpop.f32.mrf.mxu0
      %v1416 = vadd.f32 %v1252, %v1415
      %1417 = vmatmul.f32.gmra.mxu0 %v1131
      %v1418 = vpop.f32.mrf.mxu0
      %v1419 = vadd.f32 %v1252, %v1418
      %1420 = vdwg.mxu0
      %v1421 = vmul.f32 %v1278, 0.5
      %v1422 = vmul.f32 %v1301, 0.5
      %v1423 = vmul.f32 %v1324, 0.5
      %v1424 = vmul.f32 %v1347, 0.5
      %v1425 = vmul.f32 %v1370, 0.5
      %v1426 = vmul.f32 %v1393, 0.5
      %v1427 = vmul.f32 %v1416, 0.5
      %v1428 = vmul.f32 %v1281, 0.5
      %v1429 = vmul.f32 %v1304, 0.5
      %v1430 = vmul.f32 %v1327, 0.5
      %v1431 = vmul.f32 %v1350, 0.5
      %v1432 = vmul.f32 %v1373, 0.5
      %v1433 = vmul.f32 %v1396, 0.5
      %v1434 = vmul.f32 %v1419, 0.5
      %v1435 = vtanh.pop %v1421
      %v1436 = vtanh.pop %v1422
      %v1437 = vtanh.pop %v1423
      %v1438 = vtanh.pop %v1424
      %v1439 = vtanh.pop %v1425
      %v1440 = vtanh.pop %v1426
      %v1441 = vtanh.pop %v1427
      %v1442 = vtanh.pop %v1428
      %v1443 = vtanh.pop %v1429
      %v1444 = vtanh.pop %v1430
      %v1445 = vtanh.pop %v1431
      %v1446 = vtanh.pop %v1432
      %v1447 = vtanh.pop %v1433
      %v1448 = vtanh.pop %v1434
      %v1449 = vmul.f32 %v1435, 0.5
      %v1450 = vmul.f32 %v1436, 0.5
      %v1451 = vmul.f32 %v1437, 0.5
      %v1452 = vmul.f32 %v1438, 0.5
      %v1453 = vmul.f32 %v1439, 0.5
      %v1454 = vmul.f32 %v1440, 0.5
      %v1455 = vmul.f32 %v1441, 0.5
      %v1456 = vmul.f32 %v1442, 0.5
      %v1457 = vmul.f32 %v1443, 0.5
      %v1458 = vmul.f32 %v1444, 0.5
      %v1459 = vmul.f32 %v1445, 0.5
      %v1460 = vmul.f32 %v1446, 0.5
      %v1461 = vmul.f32 %v1447, 0.5
      %v1462 = vmul.f32 %v1448, 0.5
      %v1463 = vadd.f32 %v1449, 0.5
      %v1464 = vadd.f32 %v1450, 0.5
      %v1465 = vadd.f32 %v1451, 0.5
      %v1466 = vadd.f32 %v1452, 0.5
      %v1467 = vadd.f32 %v1453, 0.5
      %v1468 = vadd.f32 %v1454, 0.5
      %v1469 = vadd.f32 %v1455, 0.5
      %v1470 = vadd.f32 %v1456, 0.5
      %v1471 = vadd.f32 %v1457, 0.5
      %v1472 = vadd.f32 %v1458, 0.5
      %v1473 = vadd.f32 %v1459, 0.5
      %v1474 = vadd.f32 %v1460, 0.5
      %v1475 = vadd.f32 %v1461, 0.5
      %v1476 = vadd.f32 %v1462, 0.5
      %1477 = vst [vmem:[%s596] sm:$0xff] %v1463
      %1478 = vst [vmem:[%s596 + $0x8] sm:$0xff] %v1464
      %1479 = vst [vmem:[%s596 + $0x10] sm:$0xff] %v1465
      %1480 = vst [vmem:[%s596 + $0x18] sm:$0xff] %v1466
      %1481 = vst [vmem:[%s596 + $0x20] sm:$0xff] %v1467
      %1482 = vst [vmem:[%s596 + $0x28] sm:$0xff] %v1468
      %1483 = vst.msk [vmem:[%s596 + $0x30] sm:$0xff] %vm714, %v1469
      %1484 = vst [vmem:[%s596 + $0x38] sm:$0xff] %v1470
      %1485 = vst [vmem:[%s596 + $0x40] sm:$0xff] %v1471
      %1486 = vst [vmem:[%s596 + $0x48] sm:$0xff] %v1472
      %1487 = vst [vmem:[%s596 + $0x50] sm:$0xff] %v1473
      %1488 = vst [vmem:[%s596 + $0x58] sm:$0xff] %v1474
      %1489 = vst [vmem:[%s596 + $0x60] sm:$0xff] %v1475
      %1490 = vst.msk [vmem:[%s596 + $0x68] sm:$0xff] %vm714, %v1476
      %s1491 = smul.u32 2, %s30
      %p1492 = scmp.lt.s32.totalorder %s1491, 3
      %s1493 = scalar_select %p1492, %s1491, 3
      %s1494 = smul.addr %s1493, 8
      %s1495 = scalar_lea.vmem %s17, %s1494
      %s1496 = smul.u32 2, %s30
      %p1497 = scmp.lt.s32.totalorder %s1496, 3
      %s1498 = scalar_select %p1497, %s1496, 3
      %s1499 = smul.addr %s1498, 7
      %s1500 = smul.addr %s1499, 8
      %s1501 = scalar_lea.vmem %s18, %s1500
      // Predicated region
      $region89: #{autoencoder_forward.1} parent=87 // pred_check
        %p1502 = pneg %p410
      $region90: #{autoencoder_forward.1} parent=87 // pred_check_branch
        %1504 = sbr.rel (%p1502) target = $region92
      $region91: #{autoencoder_forward.1} parent=87 // pred_region
        %s1505 = smul.u32 2, %s30
      $region92: #{autoencoder_forward.1} parent=87 // pred_fallthru
        _
      // Predicated region
      $region93: #{autoencoder_forward.1} parent=87 // pred_check
        %p1506 = pneg %p436
      $region94: #{autoencoder_forward.1} parent=87 // pred_check_branch
        %1508 = sbr.rel (%p1506) target = $region96
      $region95: #{autoencoder_forward.1} parent=87 // pred_region
        %s1509 = smul.u32 2, %s30
      $region96: #{autoencoder_forward.1} parent=87 // pred_fallthru
        _
    $region88: #{autoencoder_forward.1} parent=5 // pred_fallthru
      _
    %p1510 = scmp.le.s32.totalorder 2, %s25
    // Predicated region
    $region97: #{autoencoder_forward.1} parent=5 // pred_check
      %p1511 = pneg %p1510
    $region98: #{autoencoder_forward.1} parent=5 // pred_check_branch
      %1513 = sbr.rel (%p1511) target = $region100
    $region99: #{autoencoder_forward.1} parent=5 // pred_region
      %s1514 = ssub.s32 %s25, 2
      // Predicated region
      $region101: #{autoencoder_forward.1} parent=99 // pred_check
        %p1515 = pneg %p416
      $region102: #{autoencoder_forward.1} parent=99 // pred_check_branch
        %1517 = sbr.rel (%p1515) target = $region104
      $region103: #{autoencoder_forward.1} parent=99 // pred_region
        %s1518 = smul.u32 2, %s31
        %p1519 = scmp.lt.s32.totalorder %s1518, 3
        %s1520 = scalar_select %p1519, %s1518, 3
        %s1521 = smul.addr %s1520, 8
        %s1522 = scalar_lea.vmem %s17, %s1521
      $region104: #{autoencoder_forward.1} parent=99 // pred_fallthru
        _
      // Predicated region
      $region105: #{autoencoder_forward.1} parent=99 // pred_check
        %p1523 = pneg %p442
      $region106: #{autoencoder_forward.1} parent=99 // pred_check_branch
        %1525 = sbr.rel (%p1523) target = $region108
      $region107: #{autoencoder_forward.1} parent=99 // pred_region
        %s1526 = smul.u32 2, %s31
        %p1527 = scmp.lt.s32.totalorder %s1526, 3
        %s1528 = scalar_select %p1527, %s1526, 3
        %s1529 = smul.addr %s1528, 7
        %s1530 = smul.addr %s1529, 8
        %s1531 = scalar_lea.vmem %s18, %s1530
      $region108: #{autoencoder_forward.1} parent=99 // pred_fallthru
        _
    $region100: #{autoencoder_forward.1} parent=5 // pred_fallthru
      _
  $region6: #{autoencoder_forward.1} parent=0 // loop_footer
    %s29 = sadd.s32 1, %s25
  $region7: #{autoencoder_forward.1} parent=0 // loop_footer_branch
    %24 = sbr.rel target = $region3
  $region8: #{autoencoder_forward.1} parent=0 // loop_exit
    _

</llo_original>
